<compile_context>
chip_gen: v7x
topology: tpu7x:2x2x1
jax: 0.10.0
libtpu: 0.0.40
codegen_flags: <defaults>
</compile_context>

<pallas_src>
import jax
import jax.numpy as jnp
from jax.experimental import pallas as pl
from jax.experimental.pallas import tpu as pltpu


def _time_encode_kernel(ts_ref, expand_ref, out_ref):
    """One row-tile of the time encoding.

    ts_ref:     (TR, G+1)  packed timestamps + trailing all-ones column
    expand_ref: (G+1, L)   folded freq/phase expansion matrix, L = G * D
    out_ref:    (TR, L)    cos(ts * freq + phase), lane-dense
    """
    mapped = jnp.dot(
        ts_ref[...],
        expand_ref[...],
        preferred_element_type=jnp.float32,
        precision=jax.lax.Precision.HIGHEST,   # do not truncate ts/freq to bf16
    )                                          # (TR, L) = ts*freq + phase
    out_ref[...] = jnp.cos(mapped).astype(out_ref.dtype)


def _pick_group(M, D):
    """Pick the lane-packing factor G (timestamps per output row)."""
    if D % 128 == 0:
        return 1                       # already lane-dense
    if 128 % D == 0:
        base = 128 // D                # smallest G giving L % 128 == 0
        best = 0
        g = base
        while g * D <= 1024:           # cap rows at 1024 lanes
            if M % g == 0:
                best = g               # prefer the largest G that divides M
            g *= 2
        if best:
            return best
        return max(base, 512 // D)     # rare fallback: pad + slice needed
    return 1                           # awkward D: full-dim blocks, masked vst


def time_encode_forward(ts, basis_freq, phase, *, out_dtype=jnp.float32):
    """JAX wrapper matching TimeEncode.forward.

    ts:         (B, S, N)  timestamps (cast to float32 like the PyTorch code)
    basis_freq: (D,)       learnable frequencies
    phase:      (D,)       learnable phases
    returns:    (B, S, N, D) in out_dtype (float32 by default)
    """
    B, S, N = ts.shape
    D = basis_freq.shape[0]
    M = B * S * N

    # ---- lane packing --------------------------------------------------
    G = _pick_group(M, D)
    L = G * D
    R = pl.cdiv(M, G)                  # packed output rows
    pad = R * G - M                    # nonzero only in the rare fallback

    # ---- row tile --------------------------------------------------------
    out_bytes = jnp.dtype(out_dtype).itemsize
    align = 8 if out_bytes >= 4 else 16          # sublane alignment per dtype
    tr_cap = max(align, ((4 << 20) // (out_bytes * L)) // align * align)
    TR = min(2048, tr_cap)                       # ~4 MiB output tile
    # keep >= ~4 grid steps so v7x's two TensorCores both get work
    quarter = (pl.cdiv(R, 4) + align - 1) // align * align
    TR = max(align, min(TR, quarter))
    grid_rows = pl.cdiv(R, TR)                   # ragged last tile is masked

    # ---- wrapper-side layout glue (input is D x smaller than the output) --
    ts_flat = ts.reshape(M).astype(jnp.float32)
    if pad:
        ts_flat = jnp.pad(ts_flat, (0, pad))
    ts_packed = ts_flat.reshape(R, G)
    ones_col = jnp.ones((R, 1), dtype=jnp.float32)
    ts2 = jnp.concatenate([ts_packed, ones_col], axis=1)          # (R, G+1)

    freq = basis_freq.astype(jnp.float32).reshape(1, D)
    ph = phase.astype(jnp.float32)
    # expand[g, g*D + d] = freq[d]  (block diagonal), expand[G, g*D + d] = ph[d]
    expand_top = jnp.kron(jnp.eye(G, dtype=jnp.float32), freq)    # (G, L)
    expand_bot = jnp.tile(ph, G).reshape(1, L)                    # (1, L)
    expand = jnp.concatenate([expand_top, expand_bot], axis=0)    # (G+1, L)

    out = pl.pallas_call(
        _time_encode_kernel,
        out_shape=jax.ShapeDtypeStruct((R, L), out_dtype),
        grid=(grid_rows,),
        in_specs=[
            pl.BlockSpec((TR, G + 1), lambda i: (i, 0)),   # packed timestamps
            pl.BlockSpec((G + 1, L), lambda i: (0, 0)),    # resident constants
        ],
        out_specs=pl.BlockSpec((TR, L), lambda i: (i, 0)),
        compiler_params=pltpu.CompilerParams(
            dimension_semantics=("parallel",),             # split across TCs
            vmem_limit_bytes=32 << 20,
        ),
    )(ts2, expand)

    # (R, G*D) row-major == (R*G, D) row-major: un-packing is a free reshape.
    out_flat = out.reshape(R * G, D)
    if pad:
        out_flat = out_flat[:M]        # only in the rare non-dividing-G case
    return out_flat.reshape(B, S, N, D)


def _reference(ts, basis_freq, phase):
    """Pure-JAX reference mirroring the PyTorch forward."""
    ts = ts.astype(jnp.float32)
    map_ts = ts[..., None] * basis_freq.reshape(1, 1, 1, -1)
    map_ts = map_ts + phase.reshape(1, 1, 1, -1)
    return jnp.cos(map_ts)


if __name__ == "__main__":
    B, S, N, time_dim = 2, 8, 16, 32

    key = jax.random.PRNGKey(0)
    k_ts, k_phase = jax.random.split(key, 2)

    ts = jax.random.uniform(k_ts, (B, S, N), dtype=jnp.float32,
                            minval=0.0, maxval=10.0)

    # Parameters as the module initializes them (phase jittered so the
    # phase-add path is exercised; it is a learnable Parameter).
    basis_freq = (1.0 / (10.0 ** jnp.linspace(0.0, 9.0, time_dim))
                  ).astype(jnp.float32)
    phase = (0.1 * jax.random.normal(k_phase, (time_dim,))).astype(jnp.float32)

    harmonic = time_encode_forward(ts, basis_freq, phase)
    harmonic = jax.block_until_ready(harmonic)

    ref = _reference(ts, basis_freq, phase)
    assert harmonic.shape == (B, S, N, time_dim)
    assert jnp.allclose(harmonic, ref, atol=1e-4, rtol=1e-4), \
        "mismatch vs reference"

    print("KERNEL_OK")
</pallas_src>

<mosaic_0001>
module attributes {stable_mosaic.version = 11 : i64} {
  func.func @_time_encode_kernel(%arg0: i32, %arg1: memref<8x33xf32, #tpu.memory_space<vmem>>, %arg2: memref<33x1024xf32, #tpu.memory_space<vmem>>, %arg3: memref<8x1024xf32, #tpu.memory_space<vmem>>) attributes {dimension_semantics = [#tpu.dimension_semantics<parallel>], iteration_bounds = array<i64: 1>, scalar_prefetch = 0 : i64, scratch_operands = 0 : i64, tpu.core_type = #tpu.core_type<tc>, window_params = [{transform_indices = @transform_0, window_bounds = array<i64: 8, 33>}, {pipeline_mode = #tpu.pipeline_mode<synchronous>, transform_indices = @transform_1, window_bounds = array<i64: 33, 1024>}, {transform_indices = @transform_2, window_bounds = array<i64: 8, 1024>}]} {
    %c0 = arith.constant 0 : index
    %c0_0 = arith.constant 0 : index
    %0 = vector.load %arg1[%c0, %c0_0] : memref<8x33xf32, #tpu.memory_space<vmem>>, vector<8x33xf32>
    %c0_1 = arith.constant 0 : index
    %c0_2 = arith.constant 0 : index
    %1 = vector.load %arg2[%c0_1, %c0_2] : memref<33x1024xf32, #tpu.memory_space<vmem>>, vector<33x1024xf32>
    %cst = arith.constant dense<0.000000e+00> : vector<8x1024xf32>
    %2 = tpu.matmul %0, %1, %cst {dimension_numbers = #tpu.dot_dimension_numbers<[1], [0], [0], [1], [0, 0, 1, 1], [], []>, precision = #tpu.contract_precision<fp32>} : vector<8x33xf32>, vector<33x1024xf32>, vector<8x1024xf32> -> vector<8x1024xf32>
    %3 = math.cos %2 : vector<8x1024xf32>
    %c0_3 = arith.constant 0 : index
    %c0_4 = arith.constant 0 : index
    %4 = vector.load %arg3[%c0_3, %c0_4] : memref<8x1024xf32, #tpu.memory_space<vmem>>, vector<8x1024xf32>
    tpu.vector_store %arg3[%c0_3, %c0_4], %3 {strides = array<i32>} : memref<8x1024xf32, #tpu.memory_space<vmem>>, vector<8x1024xf32>,
    return
  }
  func.func @transform_0(%arg0: i32) -> (i32, i32) {
    %c0_i32 = arith.constant 0 : i32
    %c0_i32_0 = arith.constant 0 : i32
    return %arg0, %c0_i32 : i32, i32
  }
  func.func @transform_1(%arg0: i32) -> (i32, i32) {
    %c0_i32 = arith.constant 0 : i32
    %c0_i32_0 = arith.constant 0 : i32
    %c0_i32_1 = arith.constant 0 : i32
    return %c0_i32, %c0_i32_0 : i32, i32
  }
  func.func @transform_2(%arg0: i32) -> (i32, i32) {
    %c0_i32 = arith.constant 0 : i32
    %c0_i32_0 = arith.constant 0 : i32
    return %arg0, %c0_i32 : i32, i32
  }
}

</mosaic_0001>

<llo_original>
// kernel: tpu_custom_call.1
$region0: #{tpu_custom_call.1}
  #allocation0 [shape = 'u32[]', space=smem, size = 0x4, offset = 0x4, fixed_abs, tag = 'smem constant byte address 0x4 - core index']
  #allocation1 [shape = 'u32[144,128]{1,0:T(1,128)}', space=vmem, size = 0x12000, scoped, tag = 'internal scratch']
  %s0 = inlined_call_operand.hbm [shape: f32[8,33], index: 0, kind: input, shape index: {}]
  %s1 = inlined_call_operand.hbm [shape: f32[33,1024], index: 1, kind: input, shape index: {}]
  %s2 = inlined_call_operand.hbm [shape: f32[8,1024], index: 2, kind: output, shape index: {}]
  %s3 = sld [smem:[#allocation0]]
  $region26: #{tpu_custom_call.1} parent=0
    _
  %s5 = ssub.s32 1, %s3
  %s6 = scalar_select 0, %s5, %s3
  $region1: #{tpu_custom_call.1} parent=0
    #allocation2 [shape = 'u8[4096]{0}', space=vmem, size = 0x1000, scoped, tag = 'input window, operand 0, single buffered']
    #allocation3 [shape = 's32[1]{0}', space=sflag, size = 0x4, scoped, tag = 'scoped memory for tpu_custom_call.1']
    #allocation4 [shape = 's32[1]{0}', space=sflag, size = 0x4, scoped, tag = 'scoped memory for tpu_custom_call.1']
    #allocation5 [shape = 'u8[163840]{0}', space=vmem, size = 0x28000, scoped, tag = 'input window, operand 1, single buffered']
    #allocation6 [shape = 's32[1]{0}', space=sflag, size = 0x4, scoped, tag = 'scoped memory for tpu_custom_call.1']
    #allocation7 [shape = 'u8[32768]{0}', space=vmem, size = 0x8000, scoped, tag = 'output window, operand 0, single buffered']
    %7 = vsyncpa [#allocation3], 0
    %8 = vsyncpa [#allocation6], 0
    %9 = vsyncpa [#allocation4], 0
    // Predicated region
    $region2: #{tpu_custom_call.1} parent=1 // pred_check
      _
    $region3: #{tpu_custom_call.1} parent=1 // pred_check_branch
      %11 = sbr.rel (0) target = $region5
    $region4: #{tpu_custom_call.1} parent=1 // pred_region
      %s13 = ssub.s32 128, 128
      %14 = vsyncadd [#allocation3], %s13
      %s16 = sshll.u32 [#allocation2], 4
      %s17 = int_to_ptr.vmem [resolvable:$true] %s16
      %19 = dma.hbm_to_vmem [thread:$0]  %s0, 128, %s17, [#allocation3]
    $region5: #{tpu_custom_call.1} parent=1 // pred_fallthru
      _
    // Predicated region
    $region6: #{tpu_custom_call.1} parent=1 // pred_check
      _
    $region7: #{tpu_custom_call.1} parent=1 // pred_check_branch
      %21 = sbr.rel (0) target = $region9
    $region8: #{tpu_custom_call.1} parent=1 // pred_region
      %s23 = ssub.s32 5120, 5120
      %24 = vsyncadd [#allocation6], %s23
      %s25 = sshll.u32 [#allocation5], 4
      %s26 = int_to_ptr.vmem [resolvable:$true] %s25
      %31 = dma.hbm_to_vmem [thread:$0]  %s1, 5120, %s26, [#allocation6], 1024, 1024, 64
    $region9: #{tpu_custom_call.1} parent=1 // pred_fallthru
      _
    // Predicated region
    $region10: #{tpu_custom_call.1} parent=1 // pred_check
      _
    $region11: #{tpu_custom_call.1} parent=1 // pred_check_branch
      %33 = sbr.rel (0) target = $region13
    $region12: #{tpu_custom_call.1} parent=1 // pred_region
      %34 = dma.done [#allocation3], 128
    $region13: #{tpu_custom_call.1} parent=1 // pred_fallthru
      _
    // Predicated region
    $region14: #{tpu_custom_call.1} parent=1 // pred_check
      _
    $region15: #{tpu_custom_call.1} parent=1 // pred_check_branch
      %36 = sbr.rel (0) target = $region17
    $region16: #{tpu_custom_call.1} parent=1 // pred_region
      %37 = dma.done [#allocation6], 5120
    $region17: #{tpu_custom_call.1} parent=1 // pred_fallthru
      _
    %v38 = vld [vmem:[#allocation2] sm:$0xff]
    %v39 = vld [vmem:[#allocation5] sm:$0xff]
    %v40 = vld [vmem:[#allocation5 + $0x8] sm:$0xff]
    %v41 = vld [vmem:[#allocation5 + $0x10] sm:$0xff]
    %v42 = vld [vmem:[#allocation5 + $0x18] sm:$0xff]
    %v43 = vld [vmem:[#allocation5 + $0x20] sm:$0xff]
    %v44 = vld [vmem:[#allocation5 + $0x28] sm:$0xff]
    %v45 = vld [vmem:[#allocation5 + $0x30] sm:$0xff]
    %v46 = vld [vmem:[#allocation5 + $0x38] sm:$0xff]
    %v47 = vld [vmem:[#allocation5 + $0x40] sm:$0xff]
    %v48 = vld [vmem:[#allocation5 + $0x48] sm:$0xff]
    %v49 = vld [vmem:[#allocation5 + $0x50] sm:$0xff]
    %v50 = vld [vmem:[#allocation5 + $0x58] sm:$0xff]
    %v51 = vld [vmem:[#allocation5 + $0x60] sm:$0xff]
    %v52 = vld [vmem:[#allocation5 + $0x68] sm:$0xff]
    %v53 = vld [vmem:[#allocation5 + $0x70] sm:$0xff]
    %v54 = vld [vmem:[#allocation5 + $0x78] sm:$0xff]
    %v55 = vld [vmem:[#allocation5 + $0x80] sm:$0xff]
    %v56 = vld [vmem:[#allocation5 + $0x88] sm:$0xff]
    %v57 = vld [vmem:[#allocation5 + $0x90] sm:$0xff]
    %v58 = vld [vmem:[#allocation5 + $0x98] sm:$0xff]
    %v59 = vld [vmem:[#allocation5 + $0xa0] sm:$0xff]
    %v60 = vld [vmem:[#allocation5 + $0xa8] sm:$0xff]
    %v61 = vld [vmem:[#allocation5 + $0xb0] sm:$0xff]
    %v62 = vld [vmem:[#allocation5 + $0xb8] sm:$0xff]
    %v63 = vld [vmem:[#allocation5 + $0xc0] sm:$0xff]
    %v64 = vld [vmem:[#allocation5 + $0xc8] sm:$0xff]
    %v65 = vld [vmem:[#allocation5 + $0xd0] sm:$0xff]
    %v66 = vld [vmem:[#allocation5 + $0xd8] sm:$0xff]
    %v67 = vld [vmem:[#allocation5 + $0xe0] sm:$0xff]
    %v68 = vld [vmem:[#allocation5 + $0xe8] sm:$0xff]
    %v69 = vld [vmem:[#allocation5 + $0xf0] sm:$0xff]
    %v70 = vld [vmem:[#allocation5 + $0xf8] sm:$0xff]
    %v71 = vld [vmem:[#allocation5 + $0x100] sm:$0x1]
    %v72 = vld [vmem:[#allocation5 + $0x108] sm:$0x1]
    %v73 = vld [vmem:[#allocation5 + $0x110] sm:$0x1]
    %v74 = vld [vmem:[#allocation5 + $0x118] sm:$0x1]
    %v75 = vld [vmem:[#allocation5 + $0x120] sm:$0x1]
    %v76 = vld [vmem:[#allocation5 + $0x128] sm:$0x1]
    %v77 = vld [vmem:[#allocation5 + $0x130] sm:$0x1]
    %v78 = vld [vmem:[#allocation5 + $0x138] sm:$0x1]
    %vm79 = vcmask 269312
    %v81 = vsel %vm79, %v38, 0
    %vm83 = vcmask 1040384
    %v85 = vsel %vm83, %v71, 0
    %v88 = vsel %vm83, %v72, 0
    %v91 = vsel %vm83, %v73, 0
    %v94 = vsel %vm83, %v74, 0
    %v97 = vsel %vm83, %v75, 0
    %v100 = vsel %vm83, %v76, 0
    %v103 = vsel %vm83, %v77, 0
    %v106 = vsel %vm83, %v78, 0
    %v108 = vand.u32 %v40, 4294901760
    %109 = vmatprep.subr.mxu0 %v108
    %v110 = vand.u32 %v39, 4294901760
    %111 = vmatpush1.msra.mxu0 %v110
    %v112 = vand.u32 %v48, 4294901760
    %113 = vmatprep.subr.mxu0 %v112
    %v114 = vand.u32 %v47, 4294901760
    %115 = vmatpush1.msra.mxu0 %v114
    %v116 = vand.u32 %v56, 4294901760
    %117 = vmatprep.subr.mxu0 %v116
    %v118 = vand.u32 %v55, 4294901760
    %119 = vmatpush1.msra.mxu0 %v118
    %v120 = vand.u32 %v64, 4294901760
    %121 = vmatprep.subr.mxu0 %v120
    %v122 = vand.u32 %v63, 4294901760
    %123 = vmatpush1.msra.mxu0 %v122
    %v124 = vand.u32 %v88, 4294901760
    %125 = vmatprep.subr.mxu0 %v124
    %v126 = vand.u32 %v85, 4294901760
    %127 = vmatpush1.msra.mxu0 %v126
    %128 = vmatprep.subr.mxu0 0.0
    %129 = vmatpush1.msra.mxu0 0.0
    %130 = vmatprep.subr.mxu0 0.0
    %131 = vmatpush1.msra.mxu0 0.0
    %132 = vmatprep.subr.mxu0 0.0
    %133 = vmatpush1.msra.mxu0 0.0
    %134 = vmatprep.subr.mxu0 0.0
    %135 = vmatpush1.msra.mxu0 0.0
    %136 = vmatprep.subr.mxu0 0.0
    %137 = vmatpush1.msra.mxu0 0.0
    %138 = vmatprep.subr.mxu0 0.0
    %139 = vmatpush1.msra.mxu0 0.0
    %140 = vmatprep.subr.mxu0 0.0
    %141 = vmatpush1.msra.mxu0 0.0
    %142 = vmatprep.subr.mxu0 0.0
    %143 = vmatpush1.msra.mxu0 0.0
    %144 = vmatprep.subr.mxu0 0.0
    %145 = vmatpush1.msra.mxu0 0.0
    %146 = vmatprep.subr.mxu0 0.0
    %147 = vmatpush1.msra.mxu0 0.0
    %148 = vmatprep.subr.mxu0 0.0
    %149 = vmatpush1.msra.mxu0 0.0
    %150 = vmatprep.subr.mxu0 0.0
    %151 = vmatpush1.msra.mxu0 0.0
    %152 = vmatprep.subr.mxu0 0.0
    %153 = vmatpush1.msra.mxu0 0.0
    %154 = vmatprep.subr.mxu0 0.0
    %155 = vmatpush1.msra.mxu0 0.0
    %156 = vmatprep.subr.mxu0 0.0
    %157 = vmatpush1.msra.mxu0 0.0
    %158 = vmatprep.subr.mxu0 0.0
    %159 = vmatpush1.msra.mxu0 0.0
    %160 = vmatprep.subr.mxu0 0.0
    %161 = vmatpush1.msra.mxu0 0.0
    %162 = vmatprep.subr.mxu0 0.0
    %163 = vmatpush1.msra.mxu0 0.0
    %164 = vmatprep.subr.mxu0 0.0
    %165 = vmatpush1.msra.mxu0 0.0
    %166 = vmatprep.subr.mxu0 0.0
    %167 = vmatpush1.msra.mxu0 0.0
    %168 = vmatprep.subr.mxu0 0.0
    %169 = vmatpush1.msra.mxu0 0.0
    %170 = vmatprep.subr.mxu0 0.0
    %171 = vmatpush1.msra.mxu0 0.0
    %172 = vmatprep.subr.mxu0 0.0
    %173 = vmatpush1.msra.mxu0 0.0
    %174 = vmatprep.subr.mxu0 0.0
    %175 = vmatpush1.msra.mxu0 0.0
    %176 = vmatprep.subr.mxu0 0.0
    %177 = vmatpush1.msra.mxu0 0.0
    %178 = vmatprep.subr.mxu0 0.0
    %179 = vmatpush1.msra.mxu0 0.0
    %180 = vmatprep.subr.mxu0 0.0
    %181 = vmatpush1.msra.mxu0 0.0
    %182 = vmatprep.mubr.f32.mxu0 0.0
    %v183 = vand.u32 %v81, 4294901760
    %v184 = vsub.f32 %v81, %v183
    %v185 = vand.u32 %v184, 4294901760
    %v186 = vsub.f32 %v184, %v185
    %v187 = vand.u32 %v186, 4294901760
    %188 = vmatmul.mubr.f32.gmra.mrb[0].mxu0 %v187
    %v189 = vpop.f32.mrb[0].mxu0
    %v190 = vadd.f32 0.0, %v189
    %v191 = vpop.f32.mrb[0].mxu0
    %v192 = vadd.f32 0.0, %v191
    %193 = vdwg.mxu0
    %v194 = vand.u32 %v40, 4294901760
    %v195 = vsub.f32 %v40, %v194
    %v196 = vand.u32 %v195, 4294901760
    %v197 = vsub.f32 %v195, %v196
    %v198 = vand.u32 %v197, 4294901760
    %199 = vmatprep.subr.mxu0 %v198
    %v200 = vand.u32 %v39, 4294901760
    %v201 = vsub.f32 %v39, %v200
    %v202 = vand.u32 %v201, 4294901760
    %v203 = vsub.f32 %v201, %v202
    %v204 = vand.u32 %v203, 4294901760
    %205 = vmatpush1.msra.mxu0 %v204
    %v206 = vand.u32 %v48, 4294901760
    %v207 = vsub.f32 %v48, %v206
    %v208 = vand.u32 %v207, 4294901760
    %v209 = vsub.f32 %v207, %v208
    %v210 = vand.u32 %v209, 4294901760
    %211 = vmatprep.subr.mxu0 %v210
    %v212 = vand.u32 %v47, 4294901760
    %v213 = vsub.f32 %v47, %v212
    %v214 = vand.u32 %v213, 4294901760
    %v215 = vsub.f32 %v213, %v214
    %v216 = vand.u32 %v215, 4294901760
    %217 = vmatpush1.msra.mxu0 %v216
    %v218 = vand.u32 %v56, 4294901760
    %v219 = vsub.f32 %v56, %v218
    %v220 = vand.u32 %v219, 4294901760
    %v221 = vsub.f32 %v219, %v220
    %v222 = vand.u32 %v221, 4294901760
    %223 = vmatprep.subr.mxu0 %v222
    %v224 = vand.u32 %v55, 4294901760
    %v225 = vsub.f32 %v55, %v224
    %v226 = vand.u32 %v225, 4294901760
    %v227 = vsub.f32 %v225, %v226
    %v228 = vand.u32 %v227, 4294901760
    %229 = vmatpush1.msra.mxu0 %v228
    %v230 = vand.u32 %v64, 4294901760
    %v231 = vsub.f32 %v64, %v230
    %v232 = vand.u32 %v231, 4294901760
    %v233 = vsub.f32 %v231, %v232
    %v234 = vand.u32 %v233, 4294901760
    %235 = vmatprep.subr.mxu0 %v234
    %v236 = vand.u32 %v63, 4294901760
    %v237 = vsub.f32 %v63, %v236
    %v238 = vand.u32 %v237, 4294901760
    %v239 = vsub.f32 %v237, %v238
    %v240 = vand.u32 %v239, 4294901760
    %241 = vmatpush1.msra.mxu0 %v240
    %v242 = vand.u32 %v88, 4294901760
    %v243 = vsub.f32 %v88, %v242
    %v244 = vand.u32 %v243, 4294901760
    %v245 = vsub.f32 %v243, %v244
    %v246 = vand.u32 %v245, 4294901760
    %247 = vmatprep.subr.mxu0 %v246
    %v248 = vand.u32 %v85, 4294901760
    %v249 = vsub.f32 %v85, %v248
    %v250 = vand.u32 %v249, 4294901760
    %v251 = vsub.f32 %v249, %v250
    %v252 = vand.u32 %v251, 4294901760
    %253 = vmatpush1.msra.mxu0 %v252
    %254 = vmatprep.subr.mxu0 0.0
    %255 = vmatpush1.msra.mxu0 0.0
    %256 = vmatprep.subr.mxu0 0.0
    %257 = vmatpush1.msra.mxu0 0.0
    %258 = vmatprep.subr.mxu0 0.0
    %259 = vmatpush1.msra.mxu0 0.0
    %260 = vmatprep.subr.mxu0 0.0
    %261 = vmatpush1.msra.mxu0 0.0
    %262 = vmatprep.subr.mxu0 0.0
    %263 = vmatpush1.msra.mxu0 0.0
    %264 = vmatprep.subr.mxu0 0.0
    %265 = vmatpush1.msra.mxu0 0.0
    %266 = vmatprep.subr.mxu0 0.0
    %267 = vmatpush1.msra.mxu0 0.0
    %268 = vmatprep.subr.mxu0 0.0
    %269 = vmatpush1.msra.mxu0 0.0
    %270 = vmatprep.subr.mxu0 0.0
    %271 = vmatpush1.msra.mxu0 0.0
    %272 = vmatprep.subr.mxu0 0.0
    %273 = vmatpush1.msra.mxu0 0.0
    %274 = vmatprep.subr.mxu0 0.0
    %275 = vmatpush1.msra.mxu0 0.0
    %276 = vmatprep.subr.mxu0 0.0
    %277 = vmatpush1.msra.mxu0 0.0
    %278 = vmatprep.subr.mxu0 0.0
    %279 = vmatpush1.msra.mxu0 0.0
    %280 = vmatprep.subr.mxu0 0.0
    %281 = vmatpush1.msra.mxu0 0.0
    %282 = vmatprep.subr.mxu0 0.0
    %283 = vmatpush1.msra.mxu0 0.0
    %284 = vmatprep.subr.mxu0 0.0
    %285 = vmatpush1.msra.mxu0 0.0
    %286 = vmatprep.subr.mxu0 0.0
    %287 = vmatpush1.msra.mxu0 0.0
    %288 = vmatprep.subr.mxu0 0.0
    %289 = vmatpush1.msra.mxu0 0.0
    %290 = vmatprep.subr.mxu0 0.0
    %291 = vmatpush1.msra.mxu0 0.0
    %292 = vmatprep.subr.mxu0 0.0
    %293 = vmatpush1.msra.mxu0 0.0
    %294 = vmatprep.subr.mxu0 0.0
    %295 = vmatpush1.msra.mxu0 0.0
    %296 = vmatprep.subr.mxu0 0.0
    %297 = vmatpush1.msra.mxu0 0.0
    %298 = vmatprep.subr.mxu0 0.0
    %299 = vmatpush1.msra.mxu0 0.0
    %300 = vmatprep.subr.mxu0 0.0
    %301 = vmatpush1.msra.mxu0 0.0
    %302 = vmatprep.subr.mxu0 0.0
    %303 = vmatpush1.msra.mxu0 0.0
    %304 = vmatprep.subr.mxu0 0.0
    %305 = vmatpush1.msra.mxu0 0.0
    %306 = vmatprep.subr.mxu0 0.0
    %307 = vmatpush1.msra.mxu0 0.0
    %308 = vmatprep.mubr.f32.mxu0 0.0
    %v309 = vand.u32 %v81, 4294901760
    %310 = vmatmul.mubr.f32.gmra.mrb[0].mxu0 %v309
    %v311 = vpop.f32.mrb[0].mxu0
    %v312 = vadd.f32 %v190, %v311
    %v313 = vpop.f32.mrb[0].mxu0
    %v314 = vadd.f32 %v192, %v313
    %315 = vdwg.mxu0
    %v316 = vand.u32 %v40, 4294901760
    %v317 = vsub.f32 %v40, %v316
    %318 = vmatprep.subr.mxu0 %v317
    %v319 = vand.u32 %v39, 4294901760
    %v320 = vsub.f32 %v39, %v319
    %321 = vmatpush1.msra.mxu0 %v320
    %v322 = vand.u32 %v48, 4294901760
    %v323 = vsub.f32 %v48, %v322
    %324 = vmatprep.subr.mxu0 %v323
    %v325 = vand.u32 %v47, 4294901760
    %v326 = vsub.f32 %v47, %v325
    %327 = vmatpush1.msra.mxu0 %v326
    %v328 = vand.u32 %v56, 4294901760
    %v329 = vsub.f32 %v56, %v328
    %330 = vmatprep.subr.mxu0 %v329
    %v331 = vand.u32 %v55, 4294901760
    %v332 = vsub.f32 %v55, %v331
    %333 = vmatpush1.msra.mxu0 %v332
    %v334 = vand.u32 %v64, 4294901760
    %v335 = vsub.f32 %v64, %v334
    %336 = vmatprep.subr.mxu0 %v335
    %v337 = vand.u32 %v63, 4294901760
    %v338 = vsub.f32 %v63, %v337
    %339 = vmatpush1.msra.mxu0 %v338
    %v340 = vand.u32 %v88, 4294901760
    %v341 = vsub.f32 %v88, %v340
    %342 = vmatprep.subr.mxu0 %v341
    %v343 = vand.u32 %v85, 4294901760
    %v344 = vsub.f32 %v85, %v343
    %345 = vmatpush1.msra.mxu0 %v344
    %346 = vmatprep.subr.mxu0 0.0
    %347 = vmatpush1.msra.mxu0 0.0
    %348 = vmatprep.subr.mxu0 0.0
    %349 = vmatpush1.msra.mxu0 0.0
    %350 = vmatprep.subr.mxu0 0.0
    %351 = vmatpush1.msra.mxu0 0.0
    %352 = vmatprep.subr.mxu0 0.0
    %353 = vmatpush1.msra.mxu0 0.0
    %354 = vmatprep.subr.mxu0 0.0
    %355 = vmatpush1.msra.mxu0 0.0
    %356 = vmatprep.subr.mxu0 0.0
    %357 = vmatpush1.msra.mxu0 0.0
    %358 = vmatprep.subr.mxu0 0.0
    %359 = vmatpush1.msra.mxu0 0.0
    %360 = vmatprep.subr.mxu0 0.0
    %361 = vmatpush1.msra.mxu0 0.0
    %362 = vmatprep.subr.mxu0 0.0
    %363 = vmatpush1.msra.mxu0 0.0
    %364 = vmatprep.subr.mxu0 0.0
    %365 = vmatpush1.msra.mxu0 0.0
    %366 = vmatprep.subr.mxu0 0.0
    %367 = vmatpush1.msra.mxu0 0.0
    %368 = vmatprep.subr.mxu0 0.0
    %369 = vmatpush1.msra.mxu0 0.0
    %370 = vmatprep.subr.mxu0 0.0
    %371 = vmatpush1.msra.mxu0 0.0
    %372 = vmatprep.subr.mxu0 0.0
    %373 = vmatpush1.msra.mxu0 0.0
    %374 = vmatprep.subr.mxu0 0.0
    %375 = vmatpush1.msra.mxu0 0.0
    %376 = vmatprep.subr.mxu0 0.0
    %377 = vmatpush1.msra.mxu0 0.0
    %378 = vmatprep.subr.mxu0 0.0
    %379 = vmatpush1.msra.mxu0 0.0
    %380 = vmatprep.subr.mxu0 0.0
    %381 = vmatpush1.msra.mxu0 0.0
    %382 = vmatprep.subr.mxu0 0.0
    %383 = vmatpush1.msra.mxu0 0.0
    %384 = vmatprep.subr.mxu0 0.0
    %385 = vmatpush1.msra.mxu0 0.0
    %386 = vmatprep.subr.mxu0 0.0
    %387 = vmatpush1.msra.mxu0 0.0
    %388 = vmatprep.subr.mxu0 0.0
    %389 = vmatpush1.msra.mxu0 0.0
    %390 = vmatprep.subr.mxu0 0.0
    %391 = vmatpush1.msra.mxu0 0.0
    %392 = vmatprep.subr.mxu0 0.0
    %393 = vmatpush1.msra.mxu0 0.0
    %394 = vmatprep.subr.mxu0 0.0
    %395 = vmatpush1.msra.mxu0 0.0
    %396 = vmatprep.subr.mxu0 0.0
    %397 = vmatpush1.msra.mxu0 0.0
    %398 = vmatprep.subr.mxu0 0.0
    %399 = vmatpush1.msra.mxu0 0.0
    %400 = vmatprep.mubr.f32.mxu0 0.0
    %v401 = vand.u32 %v81, 4294901760
    %v402 = vsub.f32 %v81, %v401
    %403 = vmatmul.mubr.f32.gmra.mrb[0].mxu0 %v402
    %v404 = vpop.f32.mrb[0].mxu0
    %v405 = vadd.f32 %v312, %v404
    %v406 = vpop.f32.mrb[0].mxu0
    %v407 = vadd.f32 %v314, %v406
    %408 = vdwg.mxu0
    %v409 = vand.u32 %v40, 4294901760
    %410 = vmatprep.subr.mxu0 %v409
    %v411 = vand.u32 %v39, 4294901760
    %412 = vmatpush1.msra.mxu0 %v411
    %v413 = vand.u32 %v48, 4294901760
    %414 = vmatprep.subr.mxu0 %v413
    %v415 = vand.u32 %v47, 4294901760
    %416 = vmatpush1.msra.mxu0 %v415
    %v417 = vand.u32 %v56, 4294901760
    %418 = vmatprep.subr.mxu0 %v417
    %v419 = vand.u32 %v55, 4294901760
    %420 = vmatpush1.msra.mxu0 %v419
    %v421 = vand.u32 %v64, 4294901760
    %422 = vmatprep.subr.mxu0 %v421
    %v423 = vand.u32 %v63, 4294901760
    %424 = vmatpush1.msra.mxu0 %v423
    %v425 = vand.u32 %v88, 4294901760
    %426 = vmatprep.subr.mxu0 %v425
    %v427 = vand.u32 %v85, 4294901760
    %428 = vmatpush1.msra.mxu0 %v427
    %429 = vmatprep.subr.mxu0 0.0
    %430 = vmatpush1.msra.mxu0 0.0
    %431 = vmatprep.subr.mxu0 0.0
    %432 = vmatpush1.msra.mxu0 0.0
    %433 = vmatprep.subr.mxu0 0.0
    %434 = vmatpush1.msra.mxu0 0.0
    %435 = vmatprep.subr.mxu0 0.0
    %436 = vmatpush1.msra.mxu0 0.0
    %437 = vmatprep.subr.mxu0 0.0
    %438 = vmatpush1.msra.mxu0 0.0
    %439 = vmatprep.subr.mxu0 0.0
    %440 = vmatpush1.msra.mxu0 0.0
    %441 = vmatprep.subr.mxu0 0.0
    %442 = vmatpush1.msra.mxu0 0.0
    %443 = vmatprep.subr.mxu0 0.0
    %444 = vmatpush1.msra.mxu0 0.0
    %445 = vmatprep.subr.mxu0 0.0
    %446 = vmatpush1.msra.mxu0 0.0
    %447 = vmatprep.subr.mxu0 0.0
    %448 = vmatpush1.msra.mxu0 0.0
    %449 = vmatprep.subr.mxu0 0.0
    %450 = vmatpush1.msra.mxu0 0.0
    %451 = vmatprep.subr.mxu0 0.0
    %452 = vmatpush1.msra.mxu0 0.0
    %453 = vmatprep.subr.mxu0 0.0
    %454 = vmatpush1.msra.mxu0 0.0
    %455 = vmatprep.subr.mxu0 0.0
    %456 = vmatpush1.msra.mxu0 0.0
    %457 = vmatprep.subr.mxu0 0.0
    %458 = vmatpush1.msra.mxu0 0.0
    %459 = vmatprep.subr.mxu0 0.0
    %460 = vmatpush1.msra.mxu0 0.0
    %461 = vmatprep.subr.mxu0 0.0
    %462 = vmatpush1.msra.mxu0 0.0
    %463 = vmatprep.subr.mxu0 0.0
    %464 = vmatpush1.msra.mxu0 0.0
    %465 = vmatprep.subr.mxu0 0.0
    %466 = vmatpush1.msra.mxu0 0.0
    %467 = vmatprep.subr.mxu0 0.0
    %468 = vmatpush1.msra.mxu0 0.0
    %469 = vmatprep.subr.mxu0 0.0
    %470 = vmatpush1.msra.mxu0 0.0
    %471 = vmatprep.subr.mxu0 0.0
    %472 = vmatpush1.msra.mxu0 0.0
    %473 = vmatprep.subr.mxu0 0.0
    %474 = vmatpush1.msra.mxu0 0.0
    %475 = vmatprep.subr.mxu0 0.0
    %476 = vmatpush1.msra.mxu0 0.0
    %477 = vmatprep.subr.mxu0 0.0
    %478 = vmatpush1.msra.mxu0 0.0
    %479 = vmatprep.subr.mxu0 0.0
    %480 = vmatpush1.msra.mxu0 0.0
    %481 = vmatprep.subr.mxu0 0.0
    %482 = vmatpush1.msra.mxu0 0.0
    %483 = vmatprep.mubr.f32.mxu0 0.0
    %v484 = vand.u32 %v81, 4294901760
    %v485 = vsub.f32 %v81, %v484
    %v486 = vand.u32 %v485, 4294901760
    %487 = vmatmul.mubr.f32.gmra.mrb[0].mxu0 %v486
    %v488 = vpop.f32.mrb[0].mxu0
    %v489 = vadd.f32 %v405, %v488
    %v490 = vpop.f32.mrb[0].mxu0
    %v491 = vadd.f32 %v407, %v490
    %492 = vdwg.mxu0
    %v493 = vand.u32 %v40, 4294901760
    %v494 = vsub.f32 %v40, %v493
    %v495 = vand.u32 %v494, 4294901760
    %496 = vmatprep.subr.mxu0 %v495
    %v497 = vand.u32 %v39, 4294901760
    %v498 = vsub.f32 %v39, %v497
    %v499 = vand.u32 %v498, 4294901760
    %500 = vmatpush1.msra.mxu0 %v499
    %v501 = vand.u32 %v48, 4294901760
    %v502 = vsub.f32 %v48, %v501
    %v503 = vand.u32 %v502, 4294901760
    %504 = vmatprep.subr.mxu0 %v503
    %v505 = vand.u32 %v47, 4294901760
    %v506 = vsub.f32 %v47, %v505
    %v507 = vand.u32 %v506, 4294901760
    %508 = vmatpush1.msra.mxu0 %v507
    %v509 = vand.u32 %v56, 4294901760
    %v510 = vsub.f32 %v56, %v509
    %v511 = vand.u32 %v510, 4294901760
    %512 = vmatprep.subr.mxu0 %v511
    %v513 = vand.u32 %v55, 4294901760
    %v514 = vsub.f32 %v55, %v513
    %v515 = vand.u32 %v514, 4294901760
    %516 = vmatpush1.msra.mxu0 %v515
    %v517 = vand.u32 %v64, 4294901760
    %v518 = vsub.f32 %v64, %v517
    %v519 = vand.u32 %v518, 4294901760
    %520 = vmatprep.subr.mxu0 %v519
    %v521 = vand.u32 %v63, 4294901760
    %v522 = vsub.f32 %v63, %v521
    %v523 = vand.u32 %v522, 4294901760
    %524 = vmatpush1.msra.mxu0 %v523
    %v525 = vand.u32 %v88, 4294901760
    %v526 = vsub.f32 %v88, %v525
    %v527 = vand.u32 %v526, 4294901760
    %528 = vmatprep.subr.mxu0 %v527
    %v529 = vand.u32 %v85, 4294901760
    %v530 = vsub.f32 %v85, %v529
    %v531 = vand.u32 %v530, 4294901760
    %532 = vmatpush1.msra.mxu0 %v531
    %533 = vmatprep.subr.mxu0 0.0
    %534 = vmatpush1.msra.mxu0 0.0
    %535 = vmatprep.subr.mxu0 0.0
    %536 = vmatpush1.msra.mxu0 0.0
    %537 = vmatprep.subr.mxu0 0.0
    %538 = vmatpush1.msra.mxu0 0.0
    %539 = vmatprep.subr.mxu0 0.0
    %540 = vmatpush1.msra.mxu0 0.0
    %541 = vmatprep.subr.mxu0 0.0
    %542 = vmatpush1.msra.mxu0 0.0
    %543 = vmatprep.subr.mxu0 0.0
    %544 = vmatpush1.msra.mxu0 0.0
    %545 = vmatprep.subr.mxu0 0.0
    %546 = vmatpush1.msra.mxu0 0.0
    %547 = vmatprep.subr.mxu0 0.0
    %548 = vmatpush1.msra.mxu0 0.0
    %549 = vmatprep.subr.mxu0 0.0
    %550 = vmatpush1.msra.mxu0 0.0
    %551 = vmatprep.subr.mxu0 0.0
    %552 = vmatpush1.msra.mxu0 0.0
    %553 = vmatprep.subr.mxu0 0.0
    %554 = vmatpush1.msra.mxu0 0.0
    %555 = vmatprep.subr.mxu0 0.0
    %556 = vmatpush1.msra.mxu0 0.0
    %557 = vmatprep.subr.mxu0 0.0
    %558 = vmatpush1.msra.mxu0 0.0
    %559 = vmatprep.subr.mxu0 0.0
    %560 = vmatpush1.msra.mxu0 0.0
    %561 = vmatprep.subr.mxu0 0.0
    %562 = vmatpush1.msra.mxu0 0.0
    %563 = vmatprep.subr.mxu0 0.0
    %564 = vmatpush1.msra.mxu0 0.0
    %565 = vmatprep.subr.mxu0 0.0
    %566 = vmatpush1.msra.mxu0 0.0
    %567 = vmatprep.subr.mxu0 0.0
    %568 = vmatpush1.msra.mxu0 0.0
    %569 = vmatprep.subr.mxu0 0.0
    %570 = vmatpush1.msra.mxu0 0.0
    %571 = vmatprep.subr.mxu0 0.0
    %572 = vmatpush1.msra.mxu0 0.0
    %573 = vmatprep.subr.mxu0 0.0
    %574 = vmatpush1.msra.mxu0 0.0
    %575 = vmatprep.subr.mxu0 0.0
    %576 = vmatpush1.msra.mxu0 0.0
    %577 = vmatprep.subr.mxu0 0.0
    %578 = vmatpush1.msra.mxu0 0.0
    %579 = vmatprep.subr.mxu0 0.0
    %580 = vmatpush1.msra.mxu0 0.0
    %581 = vmatprep.subr.mxu0 0.0
    %582 = vmatpush1.msra.mxu0 0.0
    %583 = vmatprep.subr.mxu0 0.0
    %584 = vmatpush1.msra.mxu0 0.0
    %585 = vmatprep.subr.mxu0 0.0
    %586 = vmatpush1.msra.mxu0 0.0
    %587 = vmatprep.mubr.f32.mxu0 0.0
    %v588 = vand.u32 %v81, 4294901760
    %589 = vmatmul.mubr.f32.gmra.mrb[0].mxu0 %v588
    %v590 = vpop.f32.mrb[0].mxu0
    %v591 = vadd.f32 %v489, %v590
    %v592 = vpop.f32.mrb[0].mxu0
    %v593 = vadd.f32 %v491, %v592
    %594 = vdwg.mxu0
    %v595 = vand.u32 %v40, 4294901760
    %596 = vmatprep.subr.mxu0 %v595
    %v597 = vand.u32 %v39, 4294901760
    %598 = vmatpush1.msra.mxu0 %v597
    %v599 = vand.u32 %v48, 4294901760
    %600 = vmatprep.subr.mxu0 %v599
    %v601 = vand.u32 %v47, 4294901760
    %602 = vmatpush1.msra.mxu0 %v601
    %v603 = vand.u32 %v56, 4294901760
    %604 = vmatprep.subr.mxu0 %v603
    %v605 = vand.u32 %v55, 4294901760
    %606 = vmatpush1.msra.mxu0 %v605
    %v607 = vand.u32 %v64, 4294901760
    %608 = vmatprep.subr.mxu0 %v607
    %v609 = vand.u32 %v63, 4294901760
    %610 = vmatpush1.msra.mxu0 %v609
    %v611 = vand.u32 %v88, 4294901760
    %612 = vmatprep.subr.mxu0 %v611
    %v613 = vand.u32 %v85, 4294901760
    %614 = vmatpush1.msra.mxu0 %v613
    %615 = vmatprep.subr.mxu0 0.0
    %616 = vmatpush1.msra.mxu0 0.0
    %617 = vmatprep.subr.mxu0 0.0
    %618 = vmatpush1.msra.mxu0 0.0
    %619 = vmatprep.subr.mxu0 0.0
    %620 = vmatpush1.msra.mxu0 0.0
    %621 = vmatprep.subr.mxu0 0.0
    %622 = vmatpush1.msra.mxu0 0.0
    %623 = vmatprep.subr.mxu0 0.0
    %624 = vmatpush1.msra.mxu0 0.0
    %625 = vmatprep.subr.mxu0 0.0
    %626 = vmatpush1.msra.mxu0 0.0
    %627 = vmatprep.subr.mxu0 0.0
    %628 = vmatpush1.msra.mxu0 0.0
    %629 = vmatprep.subr.mxu0 0.0
    %630 = vmatpush1.msra.mxu0 0.0
    %631 = vmatprep.subr.mxu0 0.0
    %632 = vmatpush1.msra.mxu0 0.0
    %633 = vmatprep.subr.mxu0 0.0
    %634 = vmatpush1.msra.mxu0 0.0
    %635 = vmatprep.subr.mxu0 0.0
    %636 = vmatpush1.msra.mxu0 0.0
    %637 = vmatprep.subr.mxu0 0.0
    %638 = vmatpush1.msra.mxu0 0.0
    %639 = vmatprep.subr.mxu0 0.0
    %640 = vmatpush1.msra.mxu0 0.0
    %641 = vmatprep.subr.mxu0 0.0
    %642 = vmatpush1.msra.mxu0 0.0
    %643 = vmatprep.subr.mxu0 0.0
    %644 = vmatpush1.msra.mxu0 0.0
    %645 = vmatprep.subr.mxu0 0.0
    %646 = vmatpush1.msra.mxu0 0.0
    %647 = vmatprep.subr.mxu0 0.0
    %648 = vmatpush1.msra.mxu0 0.0
    %649 = vmatprep.subr.mxu0 0.0
    %650 = vmatpush1.msra.mxu0 0.0
    %651 = vmatprep.subr.mxu0 0.0
    %652 = vmatpush1.msra.mxu0 0.0
    %653 = vmatprep.subr.mxu0 0.0
    %654 = vmatpush1.msra.mxu0 0.0
    %655 = vmatprep.subr.mxu0 0.0
    %656 = vmatpush1.msra.mxu0 0.0
    %657 = vmatprep.subr.mxu0 0.0
    %658 = vmatpush1.msra.mxu0 0.0
    %659 = vmatprep.subr.mxu0 0.0
    %660 = vmatpush1.msra.mxu0 0.0
    %661 = vmatprep.subr.mxu0 0.0
    %662 = vmatpush1.msra.mxu0 0.0
    %663 = vmatprep.subr.mxu0 0.0
    %664 = vmatpush1.msra.mxu0 0.0
    %665 = vmatprep.subr.mxu0 0.0
    %666 = vmatpush1.msra.mxu0 0.0
    %667 = vmatprep.subr.mxu0 0.0
    %668 = vmatpush1.msra.mxu0 0.0
    %669 = vmatprep.mubr.f32.mxu0 0.0
    %v670 = vand.u32 %v81, 4294901760
    %671 = vmatmul.mubr.f32.gmra.mrb[0].mxu0 %v670
    %v672 = vpop.f32.mrb[0].mxu0
    %v673 = vadd.f32 %v591, %v672
    %v674 = vpop.f32.mrb[0].mxu0
    %v675 = vadd.f32 %v593, %v674
    %676 = vdwg.mxu0
    %v677 = vand.u32 %v42, 4294901760
    %678 = vmatprep.subr.mxu0 %v677
    %v679 = vand.u32 %v41, 4294901760
    %680 = vmatpush1.msra.mxu0 %v679
    %v681 = vand.u32 %v50, 4294901760
    %682 = vmatprep.subr.mxu0 %v681
    %v683 = vand.u32 %v49, 4294901760
    %684 = vmatpush1.msra.mxu0 %v683
    %v685 = vand.u32 %v58, 4294901760
    %686 = vmatprep.subr.mxu0 %v685
    %v687 = vand.u32 %v57, 4294901760
    %688 = vmatpush1.msra.mxu0 %v687
    %v689 = vand.u32 %v66, 4294901760
    %690 = vmatprep.subr.mxu0 %v689
    %v691 = vand.u32 %v65, 4294901760
    %692 = vmatpush1.msra.mxu0 %v691
    %v693 = vand.u32 %v94, 4294901760
    %694 = vmatprep.subr.mxu0 %v693
    %v695 = vand.u32 %v91, 4294901760
    %696 = vmatpush1.msra.mxu0 %v695
    %697 = vmatprep.subr.mxu0 0.0
    %698 = vmatpush1.msra.mxu0 0.0
    %699 = vmatprep.subr.mxu0 0.0
    %700 = vmatpush1.msra.mxu0 0.0
    %701 = vmatprep.subr.mxu0 0.0
    %702 = vmatpush1.msra.mxu0 0.0
    %703 = vmatprep.subr.mxu0 0.0
    %704 = vmatpush1.msra.mxu0 0.0
    %705 = vmatprep.subr.mxu0 0.0
    %706 = vmatpush1.msra.mxu0 0.0
    %707 = vmatprep.subr.mxu0 0.0
    %708 = vmatpush1.msra.mxu0 0.0
    %709 = vmatprep.subr.mxu0 0.0
    %710 = vmatpush1.msra.mxu0 0.0
    %711 = vmatprep.subr.mxu0 0.0
    %712 = vmatpush1.msra.mxu0 0.0
    %713 = vmatprep.subr.mxu0 0.0
    %714 = vmatpush1.msra.mxu0 0.0
    %715 = vmatprep.subr.mxu0 0.0
    %716 = vmatpush1.msra.mxu0 0.0
    %717 = vmatprep.subr.mxu0 0.0
    %718 = vmatpush1.msra.mxu0 0.0
    %719 = vmatprep.subr.mxu0 0.0
    %720 = vmatpush1.msra.mxu0 0.0
    %721 = vmatprep.subr.mxu0 0.0
    %722 = vmatpush1.msra.mxu0 0.0
    %723 = vmatprep.subr.mxu0 0.0
    %724 = vmatpush1.msra.mxu0 0.0
    %725 = vmatprep.subr.mxu0 0.0
    %726 = vmatpush1.msra.mxu0 0.0
    %727 = vmatprep.subr.mxu0 0.0
    %728 = vmatpush1.msra.mxu0 0.0
    %729 = vmatprep.subr.mxu0 0.0
    %730 = vmatpush1.msra.mxu0 0.0
    %731 = vmatprep.subr.mxu0 0.0
    %732 = vmatpush1.msra.mxu0 0.0
    %733 = vmatprep.subr.mxu0 0.0
    %734 = vmatpush1.msra.mxu0 0.0
    %735 = vmatprep.subr.mxu0 0.0
    %736 = vmatpush1.msra.mxu0 0.0
    %737 = vmatprep.subr.mxu0 0.0
    %738 = vmatpush1.msra.mxu0 0.0
    %739 = vmatprep.subr.mxu0 0.0
    %740 = vmatpush1.msra.mxu0 0.0
    %741 = vmatprep.subr.mxu0 0.0
    %742 = vmatpush1.msra.mxu0 0.0
    %743 = vmatprep.subr.mxu0 0.0
    %744 = vmatpush1.msra.mxu0 0.0
    %745 = vmatprep.subr.mxu0 0.0
    %746 = vmatpush1.msra.mxu0 0.0
    %747 = vmatprep.subr.mxu0 0.0
    %748 = vmatpush1.msra.mxu0 0.0
    %749 = vmatprep.subr.mxu0 0.0
    %750 = vmatpush1.msra.mxu0 0.0
    %751 = vmatprep.mubr.f32.mxu0 0.0
    %v752 = vand.u32 %v81, 4294901760
    %v753 = vsub.f32 %v81, %v752
    %v754 = vand.u32 %v753, 4294901760
    %v755 = vsub.f32 %v753, %v754
    %v756 = vand.u32 %v755, 4294901760
    %757 = vmatmul.mubr.f32.gmra.mrb[0].mxu0 %v756
    %v758 = vpop.f32.mrb[0].mxu0
    %v759 = vadd.f32 0.0, %v758
    %v760 = vpop.f32.mrb[0].mxu0
    %v761 = vadd.f32 0.0, %v760
    %762 = vdwg.mxu0
    %v763 = vand.u32 %v42, 4294901760
    %v764 = vsub.f32 %v42, %v763
    %v765 = vand.u32 %v764, 4294901760
    %v766 = vsub.f32 %v764, %v765
    %v767 = vand.u32 %v766, 4294901760
    %768 = vmatprep.subr.mxu0 %v767
    %v769 = vand.u32 %v41, 4294901760
    %v770 = vsub.f32 %v41, %v769
    %v771 = vand.u32 %v770, 4294901760
    %v772 = vsub.f32 %v770, %v771
    %v773 = vand.u32 %v772, 4294901760
    %774 = vmatpush1.msra.mxu0 %v773
    %v775 = vand.u32 %v50, 4294901760
    %v776 = vsub.f32 %v50, %v775
    %v777 = vand.u32 %v776, 4294901760
    %v778 = vsub.f32 %v776, %v777
    %v779 = vand.u32 %v778, 4294901760
    %780 = vmatprep.subr.mxu0 %v779
    %v781 = vand.u32 %v49, 4294901760
    %v782 = vsub.f32 %v49, %v781
    %v783 = vand.u32 %v782, 4294901760
    %v784 = vsub.f32 %v782, %v783
    %v785 = vand.u32 %v784, 4294901760
    %786 = vmatpush1.msra.mxu0 %v785
    %v787 = vand.u32 %v58, 4294901760
    %v788 = vsub.f32 %v58, %v787
    %v789 = vand.u32 %v788, 4294901760
    %v790 = vsub.f32 %v788, %v789
    %v791 = vand.u32 %v790, 4294901760
    %792 = vmatprep.subr.mxu0 %v791
    %v793 = vand.u32 %v57, 4294901760
    %v794 = vsub.f32 %v57, %v793
    %v795 = vand.u32 %v794, 4294901760
    %v796 = vsub.f32 %v794, %v795
    %v797 = vand.u32 %v796, 4294901760
    %798 = vmatpush1.msra.mxu0 %v797
    %v799 = vand.u32 %v66, 4294901760
    %v800 = vsub.f32 %v66, %v799
    %v801 = vand.u32 %v800, 4294901760
    %v802 = vsub.f32 %v800, %v801
    %v803 = vand.u32 %v802, 4294901760
    %804 = vmatprep.subr.mxu0 %v803
    %v805 = vand.u32 %v65, 4294901760
    %v806 = vsub.f32 %v65, %v805
    %v807 = vand.u32 %v806, 4294901760
    %v808 = vsub.f32 %v806, %v807
    %v809 = vand.u32 %v808, 4294901760
    %810 = vmatpush1.msra.mxu0 %v809
    %v811 = vand.u32 %v94, 4294901760
    %v812 = vsub.f32 %v94, %v811
    %v813 = vand.u32 %v812, 4294901760
    %v814 = vsub.f32 %v812, %v813
    %v815 = vand.u32 %v814, 4294901760
    %816 = vmatprep.subr.mxu0 %v815
    %v817 = vand.u32 %v91, 4294901760
    %v818 = vsub.f32 %v91, %v817
    %v819 = vand.u32 %v818, 4294901760
    %v820 = vsub.f32 %v818, %v819
    %v821 = vand.u32 %v820, 4294901760
    %822 = vmatpush1.msra.mxu0 %v821
    %823 = vmatprep.subr.mxu0 0.0
    %824 = vmatpush1.msra.mxu0 0.0
    %825 = vmatprep.subr.mxu0 0.0
    %826 = vmatpush1.msra.mxu0 0.0
    %827 = vmatprep.subr.mxu0 0.0
    %828 = vmatpush1.msra.mxu0 0.0
    %829 = vmatprep.subr.mxu0 0.0
    %830 = vmatpush1.msra.mxu0 0.0
    %831 = vmatprep.subr.mxu0 0.0
    %832 = vmatpush1.msra.mxu0 0.0
    %833 = vmatprep.subr.mxu0 0.0
    %834 = vmatpush1.msra.mxu0 0.0
    %835 = vmatprep.subr.mxu0 0.0
    %836 = vmatpush1.msra.mxu0 0.0
    %837 = vmatprep.subr.mxu0 0.0
    %838 = vmatpush1.msra.mxu0 0.0
    %839 = vmatprep.subr.mxu0 0.0
    %840 = vmatpush1.msra.mxu0 0.0
    %841 = vmatprep.subr.mxu0 0.0
    %842 = vmatpush1.msra.mxu0 0.0
    %843 = vmatprep.subr.mxu0 0.0
    %844 = vmatpush1.msra.mxu0 0.0
    %845 = vmatprep.subr.mxu0 0.0
    %846 = vmatpush1.msra.mxu0 0.0
    %847 = vmatprep.subr.mxu0 0.0
    %848 = vmatpush1.msra.mxu0 0.0
    %849 = vmatprep.subr.mxu0 0.0
    %850 = vmatpush1.msra.mxu0 0.0
    %851 = vmatprep.subr.mxu0 0.0
    %852 = vmatpush1.msra.mxu0 0.0
    %853 = vmatprep.subr.mxu0 0.0
    %854 = vmatpush1.msra.mxu0 0.0
    %855 = vmatprep.subr.mxu0 0.0
    %856 = vmatpush1.msra.mxu0 0.0
    %857 = vmatprep.subr.mxu0 0.0
    %858 = vmatpush1.msra.mxu0 0.0
    %859 = vmatprep.subr.mxu0 0.0
    %860 = vmatpush1.msra.mxu0 0.0
    %861 = vmatprep.subr.mxu0 0.0
    %862 = vmatpush1.msra.mxu0 0.0
    %863 = vmatprep.subr.mxu0 0.0
    %864 = vmatpush1.msra.mxu0 0.0
    %865 = vmatprep.subr.mxu0 0.0
    %866 = vmatpush1.msra.mxu0 0.0
    %867 = vmatprep.subr.mxu0 0.0
    %868 = vmatpush1.msra.mxu0 0.0
    %869 = vmatprep.subr.mxu0 0.0
    %870 = vmatpush1.msra.mxu0 0.0
    %871 = vmatprep.subr.mxu0 0.0
    %872 = vmatpush1.msra.mxu0 0.0
    %873 = vmatprep.subr.mxu0 0.0
    %874 = vmatpush1.msra.mxu0 0.0
    %875 = vmatprep.subr.mxu0 0.0
    %876 = vmatpush1.msra.mxu0 0.0
    %877 = vmatprep.mubr.f32.mxu0 0.0
    %v878 = vand.u32 %v81, 4294901760
    %879 = vmatmul.mubr.f32.gmra.mrb[0].mxu0 %v878
    %v880 = vpop.f32.mrb[0].mxu0
    %v881 = vadd.f32 %v759, %v880
    %v882 = vpop.f32.mrb[0].mxu0
    %v883 = vadd.f32 %v761, %v882
    %884 = vdwg.mxu0
    %v885 = vand.u32 %v42, 4294901760
    %v886 = vsub.f32 %v42, %v885
    %887 = vmatprep.subr.mxu0 %v886
    %v888 = vand.u32 %v41, 4294901760
    %v889 = vsub.f32 %v41, %v888
    %890 = vmatpush1.msra.mxu0 %v889
    %v891 = vand.u32 %v50, 4294901760
    %v892 = vsub.f32 %v50, %v891
    %893 = vmatprep.subr.mxu0 %v892
    %v894 = vand.u32 %v49, 4294901760
    %v895 = vsub.f32 %v49, %v894
    %896 = vmatpush1.msra.mxu0 %v895
    %v897 = vand.u32 %v58, 4294901760
    %v898 = vsub.f32 %v58, %v897
    %899 = vmatprep.subr.mxu0 %v898
    %v900 = vand.u32 %v57, 4294901760
    %v901 = vsub.f32 %v57, %v900
    %902 = vmatpush1.msra.mxu0 %v901
    %v903 = vand.u32 %v66, 4294901760
    %v904 = vsub.f32 %v66, %v903
    %905 = vmatprep.subr.mxu0 %v904
    %v906 = vand.u32 %v65, 4294901760
    %v907 = vsub.f32 %v65, %v906
    %908 = vmatpush1.msra.mxu0 %v907
    %v909 = vand.u32 %v94, 4294901760
    %v910 = vsub.f32 %v94, %v909
    %911 = vmatprep.subr.mxu0 %v910
    %v912 = vand.u32 %v91, 4294901760
    %v913 = vsub.f32 %v91, %v912
    %914 = vmatpush1.msra.mxu0 %v913
    %915 = vmatprep.subr.mxu0 0.0
    %916 = vmatpush1.msra.mxu0 0.0
    %917 = vmatprep.subr.mxu0 0.0
    %918 = vmatpush1.msra.mxu0 0.0
    %919 = vmatprep.subr.mxu0 0.0
    %920 = vmatpush1.msra.mxu0 0.0
    %921 = vmatprep.subr.mxu0 0.0
    %922 = vmatpush1.msra.mxu0 0.0
    %923 = vmatprep.subr.mxu0 0.0
    %924 = vmatpush1.msra.mxu0 0.0
    %925 = vmatprep.subr.mxu0 0.0
    %926 = vmatpush1.msra.mxu0 0.0
    %927 = vmatprep.subr.mxu0 0.0
    %928 = vmatpush1.msra.mxu0 0.0
    %929 = vmatprep.subr.mxu0 0.0
    %930 = vmatpush1.msra.mxu0 0.0
    %931 = vmatprep.subr.mxu0 0.0
    %932 = vmatpush1.msra.mxu0 0.0
    %933 = vmatprep.subr.mxu0 0.0
    %934 = vmatpush1.msra.mxu0 0.0
    %935 = vmatprep.subr.mxu0 0.0
    %936 = vmatpush1.msra.mxu0 0.0
    %937 = vmatprep.subr.mxu0 0.0
    %938 = vmatpush1.msra.mxu0 0.0
    %939 = vmatprep.subr.mxu0 0.0
    %940 = vmatpush1.msra.mxu0 0.0
    %941 = vmatprep.subr.mxu0 0.0
    %942 = vmatpush1.msra.mxu0 0.0
    %943 = vmatprep.subr.mxu0 0.0
    %944 = vmatpush1.msra.mxu0 0.0
    %945 = vmatprep.subr.mxu0 0.0
    %946 = vmatpush1.msra.mxu0 0.0
    %947 = vmatprep.subr.mxu0 0.0
    %948 = vmatpush1.msra.mxu0 0.0
    %949 = vmatprep.subr.mxu0 0.0
    %950 = vmatpush1.msra.mxu0 0.0
    %951 = vmatprep.subr.mxu0 0.0
    %952 = vmatpush1.msra.mxu0 0.0
    %953 = vmatprep.subr.mxu0 0.0
    %954 = vmatpush1.msra.mxu0 0.0
    %955 = vmatprep.subr.mxu0 0.0
    %956 = vmatpush1.msra.mxu0 0.0
    %957 = vmatprep.subr.mxu0 0.0
    %958 = vmatpush1.msra.mxu0 0.0
    %959 = vmatprep.subr.mxu0 0.0
    %960 = vmatpush1.msra.mxu0 0.0
    %961 = vmatprep.subr.mxu0 0.0
    %962 = vmatpush1.msra.mxu0 0.0
    %963 = vmatprep.subr.mxu0 0.0
    %964 = vmatpush1.msra.mxu0 0.0
    %965 = vmatprep.subr.mxu0 0.0
    %966 = vmatpush1.msra.mxu0 0.0
    %967 = vmatprep.subr.mxu0 0.0
    %968 = vmatpush1.msra.mxu0 0.0
    %969 = vmatprep.mubr.f32.mxu0 0.0
    %v970 = vand.u32 %v81, 4294901760
    %v971 = vsub.f32 %v81, %v970
    %972 = vmatmul.mubr.f32.gmra.mrb[0].mxu0 %v971
    %v973 = vpop.f32.mrb[0].mxu0
    %v974 = vadd.f32 %v881, %v973
    %v975 = vpop.f32.mrb[0].mxu0
    %v976 = vadd.f32 %v883, %v975
    %977 = vdwg.mxu0
    %v978 = vand.u32 %v42, 4294901760
    %979 = vmatprep.subr.mxu0 %v978
    %v980 = vand.u32 %v41, 4294901760
    %981 = vmatpush1.msra.mxu0 %v980
    %v982 = vand.u32 %v50, 4294901760
    %983 = vmatprep.subr.mxu0 %v982
    %v984 = vand.u32 %v49, 4294901760
    %985 = vmatpush1.msra.mxu0 %v984
    %v986 = vand.u32 %v58, 4294901760
    %987 = vmatprep.subr.mxu0 %v986
    %v988 = vand.u32 %v57, 4294901760
    %989 = vmatpush1.msra.mxu0 %v988
    %v990 = vand.u32 %v66, 4294901760
    %991 = vmatprep.subr.mxu0 %v990
    %v992 = vand.u32 %v65, 4294901760
    %993 = vmatpush1.msra.mxu0 %v992
    %v994 = vand.u32 %v94, 4294901760
    %995 = vmatprep.subr.mxu0 %v994
    %v996 = vand.u32 %v91, 4294901760
    %997 = vmatpush1.msra.mxu0 %v996
    %998 = vmatprep.subr.mxu0 0.0
    %999 = vmatpush1.msra.mxu0 0.0
    %1000 = vmatprep.subr.mxu0 0.0
    %1001 = vmatpush1.msra.mxu0 0.0
    %1002 = vmatprep.subr.mxu0 0.0
    %1003 = vmatpush1.msra.mxu0 0.0
    %1004 = vmatprep.subr.mxu0 0.0
    %1005 = vmatpush1.msra.mxu0 0.0
    %1006 = vmatprep.subr.mxu0 0.0
    %1007 = vmatpush1.msra.mxu0 0.0
    %1008 = vmatprep.subr.mxu0 0.0
    %1009 = vmatpush1.msra.mxu0 0.0
    %1010 = vmatprep.subr.mxu0 0.0
    %1011 = vmatpush1.msra.mxu0 0.0
    %1012 = vmatprep.subr.mxu0 0.0
    %1013 = vmatpush1.msra.mxu0 0.0
    %1014 = vmatprep.subr.mxu0 0.0
    %1015 = vmatpush1.msra.mxu0 0.0
    %1016 = vmatprep.subr.mxu0 0.0
    %1017 = vmatpush1.msra.mxu0 0.0
    %1018 = vmatprep.subr.mxu0 0.0
    %1019 = vmatpush1.msra.mxu0 0.0
    %1020 = vmatprep.subr.mxu0 0.0
    %1021 = vmatpush1.msra.mxu0 0.0
    %1022 = vmatprep.subr.mxu0 0.0
    %1023 = vmatpush1.msra.mxu0 0.0
    %1024 = vmatprep.subr.mxu0 0.0
    %1025 = vmatpush1.msra.mxu0 0.0
    %1026 = vmatprep.subr.mxu0 0.0
    %1027 = vmatpush1.msra.mxu0 0.0
    %1028 = vmatprep.subr.mxu0 0.0
    %1029 = vmatpush1.msra.mxu0 0.0
    %1030 = vmatprep.subr.mxu0 0.0
    %1031 = vmatpush1.msra.mxu0 0.0
    %1032 = vmatprep.subr.mxu0 0.0
    %1033 = vmatpush1.msra.mxu0 0.0
    %1034 = vmatprep.subr.mxu0 0.0
    %1035 = vmatpush1.msra.mxu0 0.0
    %1036 = vmatprep.subr.mxu0 0.0
    %1037 = vmatpush1.msra.mxu0 0.0
    %1038 = vmatprep.subr.mxu0 0.0
    %1039 = vmatpush1.msra.mxu0 0.0
    %1040 = vmatprep.subr.mxu0 0.0
    %1041 = vmatpush1.msra.mxu0 0.0
    %1042 = vmatprep.subr.mxu0 0.0
    %1043 = vmatpush1.msra.mxu0 0.0
    %1044 = vmatprep.subr.mxu0 0.0
    %1045 = vmatpush1.msra.mxu0 0.0
    %1046 = vmatprep.subr.mxu0 0.0
    %1047 = vmatpush1.msra.mxu0 0.0
    %1048 = vmatprep.subr.mxu0 0.0
    %1049 = vmatpush1.msra.mxu0 0.0
    %1050 = vmatprep.subr.mxu0 0.0
    %1051 = vmatpush1.msra.mxu0 0.0
    %1052 = vmatprep.mubr.f32.mxu0 0.0
    %v1053 = vand.u32 %v81, 4294901760
    %v1054 = vsub.f32 %v81, %v1053
    %v1055 = vand.u32 %v1054, 4294901760
    %1056 = vmatmul.mubr.f32.gmra.mrb[0].mxu0 %v1055
    %v1057 = vpop.f32.mrb[0].mxu0
    %v1058 = vadd.f32 %v974, %v1057
    %v1059 = vpop.f32.mrb[0].mxu0
    %v1060 = vadd.f32 %v976, %v1059
    %1061 = vdwg.mxu0
    %v1062 = vand.u32 %v42, 4294901760
    %v1063 = vsub.f32 %v42, %v1062
    %v1064 = vand.u32 %v1063, 4294901760
    %1065 = vmatprep.subr.mxu0 %v1064
    %v1066 = vand.u32 %v41, 4294901760
    %v1067 = vsub.f32 %v41, %v1066
    %v1068 = vand.u32 %v1067, 4294901760
    %1069 = vmatpush1.msra.mxu0 %v1068
    %v1070 = vand.u32 %v50, 4294901760
    %v1071 = vsub.f32 %v50, %v1070
    %v1072 = vand.u32 %v1071, 4294901760
    %1073 = vmatprep.subr.mxu0 %v1072
    %v1074 = vand.u32 %v49, 4294901760
    %v1075 = vsub.f32 %v49, %v1074
    %v1076 = vand.u32 %v1075, 4294901760
    %1077 = vmatpush1.msra.mxu0 %v1076
    %v1078 = vand.u32 %v58, 4294901760
    %v1079 = vsub.f32 %v58, %v1078
    %v1080 = vand.u32 %v1079, 4294901760
    %1081 = vmatprep.subr.mxu0 %v1080
    %v1082 = vand.u32 %v57, 4294901760
    %v1083 = vsub.f32 %v57, %v1082
    %v1084 = vand.u32 %v1083, 4294901760
    %1085 = vmatpush1.msra.mxu0 %v1084
    %v1086 = vand.u32 %v66, 4294901760
    %v1087 = vsub.f32 %v66, %v1086
    %v1088 = vand.u32 %v1087, 4294901760
    %1089 = vmatprep.subr.mxu0 %v1088
    %v1090 = vand.u32 %v65, 4294901760
    %v1091 = vsub.f32 %v65, %v1090
    %v1092 = vand.u32 %v1091, 4294901760
    %1093 = vmatpush1.msra.mxu0 %v1092
    %v1094 = vand.u32 %v94, 4294901760
    %v1095 = vsub.f32 %v94, %v1094
    %v1096 = vand.u32 %v1095, 4294901760
    %1097 = vmatprep.subr.mxu0 %v1096
    %v1098 = vand.u32 %v91, 4294901760
    %v1099 = vsub.f32 %v91, %v1098
    %v1100 = vand.u32 %v1099, 4294901760
    %1101 = vmatpush1.msra.mxu0 %v1100
    %1102 = vmatprep.subr.mxu0 0.0
    %1103 = vmatpush1.msra.mxu0 0.0
    %1104 = vmatprep.subr.mxu0 0.0
    %1105 = vmatpush1.msra.mxu0 0.0
    %1106 = vmatprep.subr.mxu0 0.0
    %1107 = vmatpush1.msra.mxu0 0.0
    %1108 = vmatprep.subr.mxu0 0.0
    %1109 = vmatpush1.msra.mxu0 0.0
    %1110 = vmatprep.subr.mxu0 0.0
    %1111 = vmatpush1.msra.mxu0 0.0
    %1112 = vmatprep.subr.mxu0 0.0
    %1113 = vmatpush1.msra.mxu0 0.0
    %1114 = vmatprep.subr.mxu0 0.0
    %1115 = vmatpush1.msra.mxu0 0.0
    %1116 = vmatprep.subr.mxu0 0.0
    %1117 = vmatpush1.msra.mxu0 0.0
    %1118 = vmatprep.subr.mxu0 0.0
    %1119 = vmatpush1.msra.mxu0 0.0
    %1120 = vmatprep.subr.mxu0 0.0
    %1121 = vmatpush1.msra.mxu0 0.0
    %1122 = vmatprep.subr.mxu0 0.0
    %1123 = vmatpush1.msra.mxu0 0.0
    %1124 = vmatprep.subr.mxu0 0.0
    %1125 = vmatpush1.msra.mxu0 0.0
    %1126 = vmatprep.subr.mxu0 0.0
    %1127 = vmatpush1.msra.mxu0 0.0
    %1128 = vmatprep.subr.mxu0 0.0
    %1129 = vmatpush1.msra.mxu0 0.0
    %1130 = vmatprep.subr.mxu0 0.0
    %1131 = vmatpush1.msra.mxu0 0.0
    %1132 = vmatprep.subr.mxu0 0.0
    %1133 = vmatpush1.msra.mxu0 0.0
    %1134 = vmatprep.subr.mxu0 0.0
    %1135 = vmatpush1.msra.mxu0 0.0
    %1136 = vmatprep.subr.mxu0 0.0
    %1137 = vmatpush1.msra.mxu0 0.0
    %1138 = vmatprep.subr.mxu0 0.0
    %1139 = vmatpush1.msra.mxu0 0.0
    %1140 = vmatprep.subr.mxu0 0.0
    %1141 = vmatpush1.msra.mxu0 0.0
    %1142 = vmatprep.subr.mxu0 0.0
    %1143 = vmatpush1.msra.mxu0 0.0
    %1144 = vmatprep.subr.mxu0 0.0
    %1145 = vmatpush1.msra.mxu0 0.0
    %1146 = vmatprep.subr.mxu0 0.0
    %1147 = vmatpush1.msra.mxu0 0.0
    %1148 = vmatprep.subr.mxu0 0.0
    %1149 = vmatpush1.msra.mxu0 0.0
    %1150 = vmatprep.subr.mxu0 0.0
    %1151 = vmatpush1.msra.mxu0 0.0
    %1152 = vmatprep.subr.mxu0 0.0
    %1153 = vmatpush1.msra.mxu0 0.0
    %1154 = vmatprep.subr.mxu0 0.0
    %1155 = vmatpush1.msra.mxu0 0.0
    %1156 = vmatprep.mubr.f32.mxu0 0.0
    %v1157 = vand.u32 %v81, 4294901760
    %1158 = vmatmul.mubr.f32.gmra.mrb[0].mxu0 %v1157
    %v1159 = vpop.f32.mrb[0].mxu0
    %v1160 = vadd.f32 %v1058, %v1159
    %v1161 = vpop.f32.mrb[0].mxu0
    %v1162 = vadd.f32 %v1060, %v1161
    %1163 = vdwg.mxu0
    %v1164 = vand.u32 %v42, 4294901760
    %1165 = vmatprep.subr.mxu0 %v1164
    %v1166 = vand.u32 %v41, 4294901760
    %1167 = vmatpush1.msra.mxu0 %v1166
    %v1168 = vand.u32 %v50, 4294901760
    %1169 = vmatprep.subr.mxu0 %v1168
    %v1170 = vand.u32 %v49, 4294901760
    %1171 = vmatpush1.msra.mxu0 %v1170
    %v1172 = vand.u32 %v58, 4294901760
    %1173 = vmatprep.subr.mxu0 %v1172
    %v1174 = vand.u32 %v57, 4294901760
    %1175 = vmatpush1.msra.mxu0 %v1174
    %v1176 = vand.u32 %v66, 4294901760
    %1177 = vmatprep.subr.mxu0 %v1176
    %v1178 = vand.u32 %v65, 4294901760
    %1179 = vmatpush1.msra.mxu0 %v1178
    %v1180 = vand.u32 %v94, 4294901760
    %1181 = vmatprep.subr.mxu0 %v1180
    %v1182 = vand.u32 %v91, 4294901760
    %1183 = vmatpush1.msra.mxu0 %v1182
    %1184 = vmatprep.subr.mxu0 0.0
    %1185 = vmatpush1.msra.mxu0 0.0
    %1186 = vmatprep.subr.mxu0 0.0
    %1187 = vmatpush1.msra.mxu0 0.0
    %1188 = vmatprep.subr.mxu0 0.0
    %1189 = vmatpush1.msra.mxu0 0.0
    %1190 = vmatprep.subr.mxu0 0.0
    %1191 = vmatpush1.msra.mxu0 0.0
    %1192 = vmatprep.subr.mxu0 0.0
    %1193 = vmatpush1.msra.mxu0 0.0
    %1194 = vmatprep.subr.mxu0 0.0
    %1195 = vmatpush1.msra.mxu0 0.0
    %1196 = vmatprep.subr.mxu0 0.0
    %1197 = vmatpush1.msra.mxu0 0.0
    %1198 = vmatprep.subr.mxu0 0.0
    %1199 = vmatpush1.msra.mxu0 0.0
    %1200 = vmatprep.subr.mxu0 0.0
    %1201 = vmatpush1.msra.mxu0 0.0
    %1202 = vmatprep.subr.mxu0 0.0
    %1203 = vmatpush1.msra.mxu0 0.0
    %1204 = vmatprep.subr.mxu0 0.0
    %1205 = vmatpush1.msra.mxu0 0.0
    %1206 = vmatprep.subr.mxu0 0.0
    %1207 = vmatpush1.msra.mxu0 0.0
    %1208 = vmatprep.subr.mxu0 0.0
    %1209 = vmatpush1.msra.mxu0 0.0
    %1210 = vmatprep.subr.mxu0 0.0
    %1211 = vmatpush1.msra.mxu0 0.0
    %1212 = vmatprep.subr.mxu0 0.0
    %1213 = vmatpush1.msra.mxu0 0.0
    %1214 = vmatprep.subr.mxu0 0.0
    %1215 = vmatpush1.msra.mxu0 0.0
    %1216 = vmatprep.subr.mxu0 0.0
    %1217 = vmatpush1.msra.mxu0 0.0
    %1218 = vmatprep.subr.mxu0 0.0
    %1219 = vmatpush1.msra.mxu0 0.0
    %1220 = vmatprep.subr.mxu0 0.0
    %1221 = vmatpush1.msra.mxu0 0.0
    %1222 = vmatprep.subr.mxu0 0.0
    %1223 = vmatpush1.msra.mxu0 0.0
    %1224 = vmatprep.subr.mxu0 0.0
    %1225 = vmatpush1.msra.mxu0 0.0
    %1226 = vmatprep.subr.mxu0 0.0
    %1227 = vmatpush1.msra.mxu0 0.0
    %1228 = vmatprep.subr.mxu0 0.0
    %1229 = vmatpush1.msra.mxu0 0.0
    %1230 = vmatprep.subr.mxu0 0.0
    %1231 = vmatpush1.msra.mxu0 0.0
    %1232 = vmatprep.subr.mxu0 0.0
    %1233 = vmatpush1.msra.mxu0 0.0
    %1234 = vmatprep.subr.mxu0 0.0
    %1235 = vmatpush1.msra.mxu0 0.0
    %1236 = vmatprep.subr.mxu0 0.0
    %1237 = vmatpush1.msra.mxu0 0.0
    %1238 = vmatprep.mubr.f32.mxu0 0.0
    %v1239 = vand.u32 %v81, 4294901760
    %1240 = vmatmul.mubr.f32.gmra.mrb[0].mxu0 %v1239
    %v1241 = vpop.f32.mrb[0].mxu0
    %v1242 = vadd.f32 %v1160, %v1241
    %v1243 = vpop.f32.mrb[0].mxu0
    %v1244 = vadd.f32 %v1162, %v1243
    %1245 = vdwg.mxu0
    %v1246 = vand.u32 %v44, 4294901760
    %1247 = vmatprep.subr.mxu0 %v1246
    %v1248 = vand.u32 %v43, 4294901760
    %1249 = vmatpush1.msra.mxu0 %v1248
    %v1250 = vand.u32 %v52, 4294901760
    %1251 = vmatprep.subr.mxu0 %v1250
    %v1252 = vand.u32 %v51, 4294901760
    %1253 = vmatpush1.msra.mxu0 %v1252
    %v1254 = vand.u32 %v60, 4294901760
    %1255 = vmatprep.subr.mxu0 %v1254
    %v1256 = vand.u32 %v59, 4294901760
    %1257 = vmatpush1.msra.mxu0 %v1256
    %v1258 = vand.u32 %v68, 4294901760
    %1259 = vmatprep.subr.mxu0 %v1258
    %v1260 = vand.u32 %v67, 4294901760
    %1261 = vmatpush1.msra.mxu0 %v1260
    %v1262 = vand.u32 %v100, 4294901760
    %1263 = vmatprep.subr.mxu0 %v1262
    %v1264 = vand.u32 %v97, 4294901760
    %1265 = vmatpush1.msra.mxu0 %v1264
    %1266 = vmatprep.subr.mxu0 0.0
    %1267 = vmatpush1.msra.mxu0 0.0
    %1268 = vmatprep.subr.mxu0 0.0
    %1269 = vmatpush1.msra.mxu0 0.0
    %1270 = vmatprep.subr.mxu0 0.0
    %1271 = vmatpush1.msra.mxu0 0.0
    %1272 = vmatprep.subr.mxu0 0.0
    %1273 = vmatpush1.msra.mxu0 0.0
    %1274 = vmatprep.subr.mxu0 0.0
    %1275 = vmatpush1.msra.mxu0 0.0
    %1276 = vmatprep.subr.mxu0 0.0
    %1277 = vmatpush1.msra.mxu0 0.0
    %1278 = vmatprep.subr.mxu0 0.0
    %1279 = vmatpush1.msra.mxu0 0.0
    %1280 = vmatprep.subr.mxu0 0.0
    %1281 = vmatpush1.msra.mxu0 0.0
    %1282 = vmatprep.subr.mxu0 0.0
    %1283 = vmatpush1.msra.mxu0 0.0
    %1284 = vmatprep.subr.mxu0 0.0
    %1285 = vmatpush1.msra.mxu0 0.0
    %1286 = vmatprep.subr.mxu0 0.0
    %1287 = vmatpush1.msra.mxu0 0.0
    %1288 = vmatprep.subr.mxu0 0.0
    %1289 = vmatpush1.msra.mxu0 0.0
    %1290 = vmatprep.subr.mxu0 0.0
    %1291 = vmatpush1.msra.mxu0 0.0
    %1292 = vmatprep.subr.mxu0 0.0
    %1293 = vmatpush1.msra.mxu0 0.0
    %1294 = vmatprep.subr.mxu0 0.0
    %1295 = vmatpush1.msra.mxu0 0.0
    %1296 = vmatprep.subr.mxu0 0.0
    %1297 = vmatpush1.msra.mxu0 0.0
    %1298 = vmatprep.subr.mxu0 0.0
    %1299 = vmatpush1.msra.mxu0 0.0
    %1300 = vmatprep.subr.mxu0 0.0
    %1301 = vmatpush1.msra.mxu0 0.0
    %1302 = vmatprep.subr.mxu0 0.0
    %1303 = vmatpush1.msra.mxu0 0.0
    %1304 = vmatprep.subr.mxu0 0.0
    %1305 = vmatpush1.msra.mxu0 0.0
    %1306 = vmatprep.subr.mxu0 0.0
    %1307 = vmatpush1.msra.mxu0 0.0
    %1308 = vmatprep.subr.mxu0 0.0
    %1309 = vmatpush1.msra.mxu0 0.0
    %1310 = vmatprep.subr.mxu0 0.0
    %1311 = vmatpush1.msra.mxu0 0.0
    %1312 = vmatprep.subr.mxu0 0.0
    %1313 = vmatpush1.msra.mxu0 0.0
    %1314 = vmatprep.subr.mxu0 0.0
    %1315 = vmatpush1.msra.mxu0 0.0
    %1316 = vmatprep.subr.mxu0 0.0
    %1317 = vmatpush1.msra.mxu0 0.0
    %1318 = vmatprep.subr.mxu0 0.0
    %1319 = vmatpush1.msra.mxu0 0.0
    %1320 = vmatprep.mubr.f32.mxu0 0.0
    %v1321 = vand.u32 %v81, 4294901760
    %v1322 = vsub.f32 %v81, %v1321
    %v1323 = vand.u32 %v1322, 4294901760
    %v1324 = vsub.f32 %v1322, %v1323
    %v1325 = vand.u32 %v1324, 4294901760
    %1326 = vmatmul.mubr.f32.gmra.mrb[0].mxu0 %v1325
    %v1327 = vpop.f32.mrb[0].mxu0
    %v1328 = vadd.f32 0.0, %v1327
    %v1329 = vpop.f32.mrb[0].mxu0
    %v1330 = vadd.f32 0.0, %v1329
    %1331 = vdwg.mxu0
    %v1332 = vand.u32 %v44, 4294901760
    %v1333 = vsub.f32 %v44, %v1332
    %v1334 = vand.u32 %v1333, 4294901760
    %v1335 = vsub.f32 %v1333, %v1334
    %v1336 = vand.u32 %v1335, 4294901760
    %1337 = vmatprep.subr.mxu0 %v1336
    %v1338 = vand.u32 %v43, 4294901760
    %v1339 = vsub.f32 %v43, %v1338
    %v1340 = vand.u32 %v1339, 4294901760
    %v1341 = vsub.f32 %v1339, %v1340
    %v1342 = vand.u32 %v1341, 4294901760
    %1343 = vmatpush1.msra.mxu0 %v1342
    %v1344 = vand.u32 %v52, 4294901760
    %v1345 = vsub.f32 %v52, %v1344
    %v1346 = vand.u32 %v1345, 4294901760
    %v1347 = vsub.f32 %v1345, %v1346
    %v1348 = vand.u32 %v1347, 4294901760
    %1349 = vmatprep.subr.mxu0 %v1348
    %v1350 = vand.u32 %v51, 4294901760
    %v1351 = vsub.f32 %v51, %v1350
    %v1352 = vand.u32 %v1351, 4294901760
    %v1353 = vsub.f32 %v1351, %v1352
    %v1354 = vand.u32 %v1353, 4294901760
    %1355 = vmatpush1.msra.mxu0 %v1354
    %v1356 = vand.u32 %v60, 4294901760
    %v1357 = vsub.f32 %v60, %v1356
    %v1358 = vand.u32 %v1357, 4294901760
    %v1359 = vsub.f32 %v1357, %v1358
    %v1360 = vand.u32 %v1359, 4294901760
    %1361 = vmatprep.subr.mxu0 %v1360
    %v1362 = vand.u32 %v59, 4294901760
    %v1363 = vsub.f32 %v59, %v1362
    %v1364 = vand.u32 %v1363, 4294901760
    %v1365 = vsub.f32 %v1363, %v1364
    %v1366 = vand.u32 %v1365, 4294901760
    %1367 = vmatpush1.msra.mxu0 %v1366
    %v1368 = vand.u32 %v68, 4294901760
    %v1369 = vsub.f32 %v68, %v1368
    %v1370 = vand.u32 %v1369, 4294901760
    %v1371 = vsub.f32 %v1369, %v1370
    %v1372 = vand.u32 %v1371, 4294901760
    %1373 = vmatprep.subr.mxu0 %v1372
    %v1374 = vand.u32 %v67, 4294901760
    %v1375 = vsub.f32 %v67, %v1374
    %v1376 = vand.u32 %v1375, 4294901760
    %v1377 = vsub.f32 %v1375, %v1376
    %v1378 = vand.u32 %v1377, 4294901760
    %1379 = vmatpush1.msra.mxu0 %v1378
    %v1380 = vand.u32 %v100, 4294901760
    %v1381 = vsub.f32 %v100, %v1380
    %v1382 = vand.u32 %v1381, 4294901760
    %v1383 = vsub.f32 %v1381, %v1382
    %v1384 = vand.u32 %v1383, 4294901760
    %1385 = vmatprep.subr.mxu0 %v1384
    %v1386 = vand.u32 %v97, 4294901760
    %v1387 = vsub.f32 %v97, %v1386
    %v1388 = vand.u32 %v1387, 4294901760
    %v1389 = vsub.f32 %v1387, %v1388
    %v1390 = vand.u32 %v1389, 4294901760
    %1391 = vmatpush1.msra.mxu0 %v1390
    %1392 = vmatprep.subr.mxu0 0.0
    %1393 = vmatpush1.msra.mxu0 0.0
    %1394 = vmatprep.subr.mxu0 0.0
    %1395 = vmatpush1.msra.mxu0 0.0
    %1396 = vmatprep.subr.mxu0 0.0
    %1397 = vmatpush1.msra.mxu0 0.0
    %1398 = vmatprep.subr.mxu0 0.0
    %1399 = vmatpush1.msra.mxu0 0.0
    %1400 = vmatprep.subr.mxu0 0.0
    %1401 = vmatpush1.msra.mxu0 0.0
    %1402 = vmatprep.subr.mxu0 0.0
    %1403 = vmatpush1.msra.mxu0 0.0
    %1404 = vmatprep.subr.mxu0 0.0
    %1405 = vmatpush1.msra.mxu0 0.0
    %1406 = vmatprep.subr.mxu0 0.0
    %1407 = vmatpush1.msra.mxu0 0.0
    %1408 = vmatprep.subr.mxu0 0.0
    %1409 = vmatpush1.msra.mxu0 0.0
    %1410 = vmatprep.subr.mxu0 0.0
    %1411 = vmatpush1.msra.mxu0 0.0
    %1412 = vmatprep.subr.mxu0 0.0
    %1413 = vmatpush1.msra.mxu0 0.0
    %1414 = vmatprep.subr.mxu0 0.0
    %1415 = vmatpush1.msra.mxu0 0.0
    %1416 = vmatprep.subr.mxu0 0.0
    %1417 = vmatpush1.msra.mxu0 0.0
    %1418 = vmatprep.subr.mxu0 0.0
    %1419 = vmatpush1.msra.mxu0 0.0
    %1420 = vmatprep.subr.mxu0 0.0
    %1421 = vmatpush1.msra.mxu0 0.0
    %1422 = vmatprep.subr.mxu0 0.0
    %1423 = vmatpush1.msra.mxu0 0.0
    %1424 = vmatprep.subr.mxu0 0.0
    %1425 = vmatpush1.msra.mxu0 0.0
    %1426 = vmatprep.subr.mxu0 0.0
    %1427 = vmatpush1.msra.mxu0 0.0
    %1428 = vmatprep.subr.mxu0 0.0
    %1429 = vmatpush1.msra.mxu0 0.0
    %1430 = vmatprep.subr.mxu0 0.0
    %1431 = vmatpush1.msra.mxu0 0.0
    %1432 = vmatprep.subr.mxu0 0.0
    %1433 = vmatpush1.msra.mxu0 0.0
    %1434 = vmatprep.subr.mxu0 0.0
    %1435 = vmatpush1.msra.mxu0 0.0
    %1436 = vmatprep.subr.mxu0 0.0
    %1437 = vmatpush1.msra.mxu0 0.0
    %1438 = vmatprep.subr.mxu0 0.0
    %1439 = vmatpush1.msra.mxu0 0.0
    %1440 = vmatprep.subr.mxu0 0.0
    %1441 = vmatpush1.msra.mxu0 0.0
    %1442 = vmatprep.subr.mxu0 0.0
    %1443 = vmatpush1.msra.mxu0 0.0
    %1444 = vmatprep.subr.mxu0 0.0
    %1445 = vmatpush1.msra.mxu0 0.0
    %1446 = vmatprep.mubr.f32.mxu0 0.0
    %v1447 = vand.u32 %v81, 4294901760
    %1448 = vmatmul.mubr.f32.gmra.mrb[0].mxu0 %v1447
    %v1449 = vpop.f32.mrb[0].mxu0
    %v1450 = vadd.f32 %v1328, %v1449
    %v1451 = vpop.f32.mrb[0].mxu0
    %v1452 = vadd.f32 %v1330, %v1451
    %1453 = vdwg.mxu0
    %v1454 = vand.u32 %v44, 4294901760
    %v1455 = vsub.f32 %v44, %v1454
    %1456 = vmatprep.subr.mxu0 %v1455
    %v1457 = vand.u32 %v43, 4294901760
    %v1458 = vsub.f32 %v43, %v1457
    %1459 = vmatpush1.msra.mxu0 %v1458
    %v1460 = vand.u32 %v52, 4294901760
    %v1461 = vsub.f32 %v52, %v1460
    %1462 = vmatprep.subr.mxu0 %v1461
    %v1463 = vand.u32 %v51, 4294901760
    %v1464 = vsub.f32 %v51, %v1463
    %1465 = vmatpush1.msra.mxu0 %v1464
    %v1466 = vand.u32 %v60, 4294901760
    %v1467 = vsub.f32 %v60, %v1466
    %1468 = vmatprep.subr.mxu0 %v1467
    %v1469 = vand.u32 %v59, 4294901760
    %v1470 = vsub.f32 %v59, %v1469
    %1471 = vmatpush1.msra.mxu0 %v1470
    %v1472 = vand.u32 %v68, 4294901760
    %v1473 = vsub.f32 %v68, %v1472
    %1474 = vmatprep.subr.mxu0 %v1473
    %v1475 = vand.u32 %v67, 4294901760
    %v1476 = vsub.f32 %v67, %v1475
    %1477 = vmatpush1.msra.mxu0 %v1476
    %v1478 = vand.u32 %v100, 4294901760
    %v1479 = vsub.f32 %v100, %v1478
    %1480 = vmatprep.subr.mxu0 %v1479
    %v1481 = vand.u32 %v97, 4294901760
    %v1482 = vsub.f32 %v97, %v1481
    %1483 = vmatpush1.msra.mxu0 %v1482
    %1484 = vmatprep.subr.mxu0 0.0
    %1485 = vmatpush1.msra.mxu0 0.0
    %1486 = vmatprep.subr.mxu0 0.0
    %1487 = vmatpush1.msra.mxu0 0.0
    %1488 = vmatprep.subr.mxu0 0.0
    %1489 = vmatpush1.msra.mxu0 0.0
    %1490 = vmatprep.subr.mxu0 0.0
    %1491 = vmatpush1.msra.mxu0 0.0
    %1492 = vmatprep.subr.mxu0 0.0
    %1493 = vmatpush1.msra.mxu0 0.0
    %1494 = vmatprep.subr.mxu0 0.0
    %1495 = vmatpush1.msra.mxu0 0.0
    %1496 = vmatprep.subr.mxu0 0.0
    %1497 = vmatpush1.msra.mxu0 0.0
    %1498 = vmatprep.subr.mxu0 0.0
    %1499 = vmatpush1.msra.mxu0 0.0
    %1500 = vmatprep.subr.mxu0 0.0
    %1501 = vmatpush1.msra.mxu0 0.0
    %1502 = vmatprep.subr.mxu0 0.0
    %1503 = vmatpush1.msra.mxu0 0.0
    %1504 = vmatprep.subr.mxu0 0.0
    %1505 = vmatpush1.msra.mxu0 0.0
    %1506 = vmatprep.subr.mxu0 0.0
    %1507 = vmatpush1.msra.mxu0 0.0
    %1508 = vmatprep.subr.mxu0 0.0
    %1509 = vmatpush1.msra.mxu0 0.0
    %1510 = vmatprep.subr.mxu0 0.0
    %1511 = vmatpush1.msra.mxu0 0.0
    %1512 = vmatprep.subr.mxu0 0.0
    %1513 = vmatpush1.msra.mxu0 0.0
    %1514 = vmatprep.subr.mxu0 0.0
    %1515 = vmatpush1.msra.mxu0 0.0
    %1516 = vmatprep.subr.mxu0 0.0
    %1517 = vmatpush1.msra.mxu0 0.0
    %1518 = vmatprep.subr.mxu0 0.0
    %1519 = vmatpush1.msra.mxu0 0.0
    %1520 = vmatprep.subr.mxu0 0.0
    %1521 = vmatpush1.msra.mxu0 0.0
    %1522 = vmatprep.subr.mxu0 0.0
    %1523 = vmatpush1.msra.mxu0 0.0
    %1524 = vmatprep.subr.mxu0 0.0
    %1525 = vmatpush1.msra.mxu0 0.0
    %1526 = vmatprep.subr.mxu0 0.0
    %1527 = vmatpush1.msra.mxu0 0.0
    %1528 = vmatprep.subr.mxu0 0.0
    %1529 = vmatpush1.msra.mxu0 0.0
    %1530 = vmatprep.subr.mxu0 0.0
    %1531 = vmatpush1.msra.mxu0 0.0
    %1532 = vmatprep.subr.mxu0 0.0
    %1533 = vmatpush1.msra.mxu0 0.0
    %1534 = vmatprep.subr.mxu0 0.0
    %1535 = vmatpush1.msra.mxu0 0.0
    %1536 = vmatprep.subr.mxu0 0.0
    %1537 = vmatpush1.msra.mxu0 0.0
    %1538 = vmatprep.mubr.f32.mxu0 0.0
    %v1539 = vand.u32 %v81, 4294901760
    %v1540 = vsub.f32 %v81, %v1539
    %1541 = vmatmul.mubr.f32.gmra.mrb[0].mxu0 %v1540
    %v1542 = vpop.f32.mrb[0].mxu0
    %v1543 = vadd.f32 %v1450, %v1542
    %v1544 = vpop.f32.mrb[0].mxu0
    %v1545 = vadd.f32 %v1452, %v1544
    %1546 = vdwg.mxu0
    %v1547 = vand.u32 %v44, 4294901760
    %1548 = vmatprep.subr.mxu0 %v1547
    %v1549 = vand.u32 %v43, 4294901760
    %1550 = vmatpush1.msra.mxu0 %v1549
    %v1551 = vand.u32 %v52, 4294901760
    %1552 = vmatprep.subr.mxu0 %v1551
    %v1553 = vand.u32 %v51, 4294901760
    %1554 = vmatpush1.msra.mxu0 %v1553
    %v1555 = vand.u32 %v60, 4294901760
    %1556 = vmatprep.subr.mxu0 %v1555
    %v1557 = vand.u32 %v59, 4294901760
    %1558 = vmatpush1.msra.mxu0 %v1557
    %v1559 = vand.u32 %v68, 4294901760
    %1560 = vmatprep.subr.mxu0 %v1559
    %v1561 = vand.u32 %v67, 4294901760
    %1562 = vmatpush1.msra.mxu0 %v1561
    %v1563 = vand.u32 %v100, 4294901760
    %1564 = vmatprep.subr.mxu0 %v1563
    %v1565 = vand.u32 %v97, 4294901760
    %1566 = vmatpush1.msra.mxu0 %v1565
    %1567 = vmatprep.subr.mxu0 0.0
    %1568 = vmatpush1.msra.mxu0 0.0
    %1569 = vmatprep.subr.mxu0 0.0
    %1570 = vmatpush1.msra.mxu0 0.0
    %1571 = vmatprep.subr.mxu0 0.0
    %1572 = vmatpush1.msra.mxu0 0.0
    %1573 = vmatprep.subr.mxu0 0.0
    %1574 = vmatpush1.msra.mxu0 0.0
    %1575 = vmatprep.subr.mxu0 0.0
    %1576 = vmatpush1.msra.mxu0 0.0
    %1577 = vmatprep.subr.mxu0 0.0
    %1578 = vmatpush1.msra.mxu0 0.0
    %1579 = vmatprep.subr.mxu0 0.0
    %1580 = vmatpush1.msra.mxu0 0.0
    %1581 = vmatprep.subr.mxu0 0.0
    %1582 = vmatpush1.msra.mxu0 0.0
    %1583 = vmatprep.subr.mxu0 0.0
    %1584 = vmatpush1.msra.mxu0 0.0
    %1585 = vmatprep.subr.mxu0 0.0
    %1586 = vmatpush1.msra.mxu0 0.0
    %1587 = vmatprep.subr.mxu0 0.0
    %1588 = vmatpush1.msra.mxu0 0.0
    %1589 = vmatprep.subr.mxu0 0.0
    %1590 = vmatpush1.msra.mxu0 0.0
    %1591 = vmatprep.subr.mxu0 0.0
    %1592 = vmatpush1.msra.mxu0 0.0
    %1593 = vmatprep.subr.mxu0 0.0
    %1594 = vmatpush1.msra.mxu0 0.0
    %1595 = vmatprep.subr.mxu0 0.0
    %1596 = vmatpush1.msra.mxu0 0.0
    %1597 = vmatprep.subr.mxu0 0.0
    %1598 = vmatpush1.msra.mxu0 0.0
    %1599 = vmatprep.subr.mxu0 0.0
    %1600 = vmatpush1.msra.mxu0 0.0
    %1601 = vmatprep.subr.mxu0 0.0
    %1602 = vmatpush1.msra.mxu0 0.0
    %1603 = vmatprep.subr.mxu0 0.0
    %1604 = vmatpush1.msra.mxu0 0.0
    %1605 = vmatprep.subr.mxu0 0.0
    %1606 = vmatpush1.msra.mxu0 0.0
    %1607 = vmatprep.subr.mxu0 0.0
    %1608 = vmatpush1.msra.mxu0 0.0
    %1609 = vmatprep.subr.mxu0 0.0
    %1610 = vmatpush1.msra.mxu0 0.0
    %1611 = vmatprep.subr.mxu0 0.0
    %1612 = vmatpush1.msra.mxu0 0.0
    %1613 = vmatprep.subr.mxu0 0.0
    %1614 = vmatpush1.msra.mxu0 0.0
    %1615 = vmatprep.subr.mxu0 0.0
    %1616 = vmatpush1.msra.mxu0 0.0
    %1617 = vmatprep.subr.mxu0 0.0
    %1618 = vmatpush1.msra.mxu0 0.0
    %1619 = vmatprep.subr.mxu0 0.0
    %1620 = vmatpush1.msra.mxu0 0.0
    %1621 = vmatprep.mubr.f32.mxu0 0.0
    %v1622 = vand.u32 %v81, 4294901760
    %v1623 = vsub.f32 %v81, %v1622
    %v1624 = vand.u32 %v1623, 4294901760
    %1625 = vmatmul.mubr.f32.gmra.mrb[0].mxu0 %v1624
    %v1626 = vpop.f32.mrb[0].mxu0
    %v1627 = vadd.f32 %v1543, %v1626
    %v1628 = vpop.f32.mrb[0].mxu0
    %v1629 = vadd.f32 %v1545, %v1628
    %1630 = vdwg.mxu0
    %v1631 = vand.u32 %v44, 4294901760
    %v1632 = vsub.f32 %v44, %v1631
    %v1633 = vand.u32 %v1632, 4294901760
    %1634 = vmatprep.subr.mxu0 %v1633
    %v1635 = vand.u32 %v43, 4294901760
    %v1636 = vsub.f32 %v43, %v1635
    %v1637 = vand.u32 %v1636, 4294901760
    %1638 = vmatpush1.msra.mxu0 %v1637
    %v1639 = vand.u32 %v52, 4294901760
    %v1640 = vsub.f32 %v52, %v1639
    %v1641 = vand.u32 %v1640, 4294901760
    %1642 = vmatprep.subr.mxu0 %v1641
    %v1643 = vand.u32 %v51, 4294901760
    %v1644 = vsub.f32 %v51, %v1643
    %v1645 = vand.u32 %v1644, 4294901760
    %1646 = vmatpush1.msra.mxu0 %v1645
    %v1647 = vand.u32 %v60, 4294901760
    %v1648 = vsub.f32 %v60, %v1647
    %v1649 = vand.u32 %v1648, 4294901760
    %1650 = vmatprep.subr.mxu0 %v1649
    %v1651 = vand.u32 %v59, 4294901760
    %v1652 = vsub.f32 %v59, %v1651
    %v1653 = vand.u32 %v1652, 4294901760
    %1654 = vmatpush1.msra.mxu0 %v1653
    %v1655 = vand.u32 %v68, 4294901760
    %v1656 = vsub.f32 %v68, %v1655
    %v1657 = vand.u32 %v1656, 4294901760
    %1658 = vmatprep.subr.mxu0 %v1657
    %v1659 = vand.u32 %v67, 4294901760
    %v1660 = vsub.f32 %v67, %v1659
    %v1661 = vand.u32 %v1660, 4294901760
    %1662 = vmatpush1.msra.mxu0 %v1661
    %v1663 = vand.u32 %v100, 4294901760
    %v1664 = vsub.f32 %v100, %v1663
    %v1665 = vand.u32 %v1664, 4294901760
    %1666 = vmatprep.subr.mxu0 %v1665
    %v1667 = vand.u32 %v97, 4294901760
    %v1668 = vsub.f32 %v97, %v1667
    %v1669 = vand.u32 %v1668, 4294901760
    %1670 = vmatpush1.msra.mxu0 %v1669
    %1671 = vmatprep.subr.mxu0 0.0
    %1672 = vmatpush1.msra.mxu0 0.0
    %1673 = vmatprep.subr.mxu0 0.0
    %1674 = vmatpush1.msra.mxu0 0.0
    %1675 = vmatprep.subr.mxu0 0.0
    %1676 = vmatpush1.msra.mxu0 0.0
    %1677 = vmatprep.subr.mxu0 0.0
    %1678 = vmatpush1.msra.mxu0 0.0
    %1679 = vmatprep.subr.mxu0 0.0
    %1680 = vmatpush1.msra.mxu0 0.0
    %1681 = vmatprep.subr.mxu0 0.0
    %1682 = vmatpush1.msra.mxu0 0.0
    %1683 = vmatprep.subr.mxu0 0.0
    %1684 = vmatpush1.msra.mxu0 0.0
    %1685 = vmatprep.subr.mxu0 0.0
    %1686 = vmatpush1.msra.mxu0 0.0
    %1687 = vmatprep.subr.mxu0 0.0
    %1688 = vmatpush1.msra.mxu0 0.0
    %1689 = vmatprep.subr.mxu0 0.0
    %1690 = vmatpush1.msra.mxu0 0.0
    %1691 = vmatprep.subr.mxu0 0.0
    %1692 = vmatpush1.msra.mxu0 0.0
    %1693 = vmatprep.subr.mxu0 0.0
    %1694 = vmatpush1.msra.mxu0 0.0
    %1695 = vmatprep.subr.mxu0 0.0
    %1696 = vmatpush1.msra.mxu0 0.0
    %1697 = vmatprep.subr.mxu0 0.0
    %1698 = vmatpush1.msra.mxu0 0.0
    %1699 = vmatprep.subr.mxu0 0.0
    %1700 = vmatpush1.msra.mxu0 0.0
    %1701 = vmatprep.subr.mxu0 0.0
    %1702 = vmatpush1.msra.mxu0 0.0
    %1703 = vmatprep.subr.mxu0 0.0
    %1704 = vmatpush1.msra.mxu0 0.0
    %1705 = vmatprep.subr.mxu0 0.0
    %1706 = vmatpush1.msra.mxu0 0.0
    %1707 = vmatprep.subr.mxu0 0.0
    %1708 = vmatpush1.msra.mxu0 0.0
    %1709 = vmatprep.subr.mxu0 0.0
    %1710 = vmatpush1.msra.mxu0 0.0
    %1711 = vmatprep.subr.mxu0 0.0
    %1712 = vmatpush1.msra.mxu0 0.0
    %1713 = vmatprep.subr.mxu0 0.0
    %1714 = vmatpush1.msra.mxu0 0.0
    %1715 = vmatprep.subr.mxu0 0.0
    %1716 = vmatpush1.msra.mxu0 0.0
    %1717 = vmatprep.subr.mxu0 0.0
    %1718 = vmatpush1.msra.mxu0 0.0
    %1719 = vmatprep.subr.mxu0 0.0
    %1720 = vmatpush1.msra.mxu0 0.0
    %1721 = vmatprep.subr.mxu0 0.0
    %1722 = vmatpush1.msra.mxu0 0.0
    %1723 = vmatprep.subr.mxu0 0.0
    %1724 = vmatpush1.msra.mxu0 0.0
    %1725 = vmatprep.mubr.f32.mxu0 0.0
    %v1726 = vand.u32 %v81, 4294901760
    %1727 = vmatmul.mubr.f32.gmra.mrb[0].mxu0 %v1726
    %v1728 = vpop.f32.mrb[0].mxu0
    %v1729 = vadd.f32 %v1627, %v1728
    %v1730 = vpop.f32.mrb[0].mxu0
    %v1731 = vadd.f32 %v1629, %v1730
    %1732 = vdwg.mxu0
    %v1733 = vand.u32 %v44, 4294901760
    %1734 = vmatprep.subr.mxu0 %v1733
    %v1735 = vand.u32 %v43, 4294901760
    %1736 = vmatpush1.msra.mxu0 %v1735
    %v1737 = vand.u32 %v52, 4294901760
    %1738 = vmatprep.subr.mxu0 %v1737
    %v1739 = vand.u32 %v51, 4294901760
    %1740 = vmatpush1.msra.mxu0 %v1739
    %v1741 = vand.u32 %v60, 4294901760
    %1742 = vmatprep.subr.mxu0 %v1741
    %v1743 = vand.u32 %v59, 4294901760
    %1744 = vmatpush1.msra.mxu0 %v1743
    %v1745 = vand.u32 %v68, 4294901760
    %1746 = vmatprep.subr.mxu0 %v1745
    %v1747 = vand.u32 %v67, 4294901760
    %1748 = vmatpush1.msra.mxu0 %v1747
    %v1749 = vand.u32 %v100, 4294901760
    %1750 = vmatprep.subr.mxu0 %v1749
    %v1751 = vand.u32 %v97, 4294901760
    %1752 = vmatpush1.msra.mxu0 %v1751
    %1753 = vmatprep.subr.mxu0 0.0
    %1754 = vmatpush1.msra.mxu0 0.0
    %1755 = vmatprep.subr.mxu0 0.0
    %1756 = vmatpush1.msra.mxu0 0.0
    %1757 = vmatprep.subr.mxu0 0.0
    %1758 = vmatpush1.msra.mxu0 0.0
    %1759 = vmatprep.subr.mxu0 0.0
    %1760 = vmatpush1.msra.mxu0 0.0
    %1761 = vmatprep.subr.mxu0 0.0
    %1762 = vmatpush1.msra.mxu0 0.0
    %1763 = vmatprep.subr.mxu0 0.0
    %1764 = vmatpush1.msra.mxu0 0.0
    %1765 = vmatprep.subr.mxu0 0.0
    %1766 = vmatpush1.msra.mxu0 0.0
    %1767 = vmatprep.subr.mxu0 0.0
    %1768 = vmatpush1.msra.mxu0 0.0
    %1769 = vmatprep.subr.mxu0 0.0
    %1770 = vmatpush1.msra.mxu0 0.0
    %1771 = vmatprep.subr.mxu0 0.0
    %1772 = vmatpush1.msra.mxu0 0.0
    %1773 = vmatprep.subr.mxu0 0.0
    %1774 = vmatpush1.msra.mxu0 0.0
    %1775 = vmatprep.subr.mxu0 0.0
    %1776 = vmatpush1.msra.mxu0 0.0
    %1777 = vmatprep.subr.mxu0 0.0
    %1778 = vmatpush1.msra.mxu0 0.0
    %1779 = vmatprep.subr.mxu0 0.0
    %1780 = vmatpush1.msra.mxu0 0.0
    %1781 = vmatprep.subr.mxu0 0.0
    %1782 = vmatpush1.msra.mxu0 0.0
    %1783 = vmatprep.subr.mxu0 0.0
    %1784 = vmatpush1.msra.mxu0 0.0
    %1785 = vmatprep.subr.mxu0 0.0
    %1786 = vmatpush1.msra.mxu0 0.0
    %1787 = vmatprep.subr.mxu0 0.0
    %1788 = vmatpush1.msra.mxu0 0.0
    %1789 = vmatprep.subr.mxu0 0.0
    %1790 = vmatpush1.msra.mxu0 0.0
    %1791 = vmatprep.subr.mxu0 0.0
    %1792 = vmatpush1.msra.mxu0 0.0
    %1793 = vmatprep.subr.mxu0 0.0
    %1794 = vmatpush1.msra.mxu0 0.0
    %1795 = vmatprep.subr.mxu0 0.0
    %1796 = vmatpush1.msra.mxu0 0.0
    %1797 = vmatprep.subr.mxu0 0.0
    %1798 = vmatpush1.msra.mxu0 0.0
    %1799 = vmatprep.subr.mxu0 0.0
    %1800 = vmatpush1.msra.mxu0 0.0
    %1801 = vmatprep.subr.mxu0 0.0
    %1802 = vmatpush1.msra.mxu0 0.0
    %1803 = vmatprep.subr.mxu0 0.0
    %1804 = vmatpush1.msra.mxu0 0.0
    %1805 = vmatprep.subr.mxu0 0.0
    %1806 = vmatpush1.msra.mxu0 0.0
    %1807 = vmatprep.mubr.f32.mxu0 0.0
    %v1808 = vand.u32 %v81, 4294901760
    %1809 = vmatmul.mubr.f32.gmra.mrb[0].mxu0 %v1808
    %v1810 = vpop.f32.mrb[0].mxu0
    %v1811 = vadd.f32 %v1729, %v1810
    %v1812 = vpop.f32.mrb[0].mxu0
    %v1813 = vadd.f32 %v1731, %v1812
    %1814 = vdwg.mxu0
    %v1815 = vand.u32 %v46, 4294901760
    %1816 = vmatprep.subr.mxu0 %v1815
    %v1817 = vand.u32 %v45, 4294901760
    %1818 = vmatpush1.msra.mxu0 %v1817
    %v1819 = vand.u32 %v54, 4294901760
    %1820 = vmatprep.subr.mxu0 %v1819
    %v1821 = vand.u32 %v53, 4294901760
    %1822 = vmatpush1.msra.mxu0 %v1821
    %v1823 = vand.u32 %v62, 4294901760
    %1824 = vmatprep.subr.mxu0 %v1823
    %v1825 = vand.u32 %v61, 4294901760
    %1826 = vmatpush1.msra.mxu0 %v1825
    %v1827 = vand.u32 %v70, 4294901760
    %1828 = vmatprep.subr.mxu0 %v1827
    %v1829 = vand.u32 %v69, 4294901760
    %1830 = vmatpush1.msra.mxu0 %v1829
    %v1831 = vand.u32 %v106, 4294901760
    %1832 = vmatprep.subr.mxu0 %v1831
    %v1833 = vand.u32 %v103, 4294901760
    %1834 = vmatpush1.msra.mxu0 %v1833
    %1835 = vmatprep.subr.mxu0 0.0
    %1836 = vmatpush1.msra.mxu0 0.0
    %1837 = vmatprep.subr.mxu0 0.0
    %1838 = vmatpush1.msra.mxu0 0.0
    %1839 = vmatprep.subr.mxu0 0.0
    %1840 = vmatpush1.msra.mxu0 0.0
    %1841 = vmatprep.subr.mxu0 0.0
    %1842 = vmatpush1.msra.mxu0 0.0
    %1843 = vmatprep.subr.mxu0 0.0
    %1844 = vmatpush1.msra.mxu0 0.0
    %1845 = vmatprep.subr.mxu0 0.0
    %1846 = vmatpush1.msra.mxu0 0.0
    %1847 = vmatprep.subr.mxu0 0.0
    %1848 = vmatpush1.msra.mxu0 0.0
    %1849 = vmatprep.subr.mxu0 0.0
    %1850 = vmatpush1.msra.mxu0 0.0
    %1851 = vmatprep.subr.mxu0 0.0
    %1852 = vmatpush1.msra.mxu0 0.0
    %1853 = vmatprep.subr.mxu0 0.0
    %1854 = vmatpush1.msra.mxu0 0.0
    %1855 = vmatprep.subr.mxu0 0.0
    %1856 = vmatpush1.msra.mxu0 0.0
    %1857 = vmatprep.subr.mxu0 0.0
    %1858 = vmatpush1.msra.mxu0 0.0
    %1859 = vmatprep.subr.mxu0 0.0
    %1860 = vmatpush1.msra.mxu0 0.0
    %1861 = vmatprep.subr.mxu0 0.0
    %1862 = vmatpush1.msra.mxu0 0.0
    %1863 = vmatprep.subr.mxu0 0.0
    %1864 = vmatpush1.msra.mxu0 0.0
    %1865 = vmatprep.subr.mxu0 0.0
    %1866 = vmatpush1.msra.mxu0 0.0
    %1867 = vmatprep.subr.mxu0 0.0
    %1868 = vmatpush1.msra.mxu0 0.0
    %1869 = vmatprep.subr.mxu0 0.0
    %1870 = vmatpush1.msra.mxu0 0.0
    %1871 = vmatprep.subr.mxu0 0.0
    %1872 = vmatpush1.msra.mxu0 0.0
    %1873 = vmatprep.subr.mxu0 0.0
    %1874 = vmatpush1.msra.mxu0 0.0
    %1875 = vmatprep.subr.mxu0 0.0
    %1876 = vmatpush1.msra.mxu0 0.0
    %1877 = vmatprep.subr.mxu0 0.0
    %1878 = vmatpush1.msra.mxu0 0.0
    %1879 = vmatprep.subr.mxu0 0.0
    %1880 = vmatpush1.msra.mxu0 0.0
    %1881 = vmatprep.subr.mxu0 0.0
    %1882 = vmatpush1.msra.mxu0 0.0
    %1883 = vmatprep.subr.mxu0 0.0
    %1884 = vmatpush1.msra.mxu0 0.0
    %1885 = vmatprep.subr.mxu0 0.0
    %1886 = vmatpush1.msra.mxu0 0.0
    %1887 = vmatprep.subr.mxu0 0.0
    %1888 = vmatpush1.msra.mxu0 0.0
    %1889 = vmatprep.mubr.f32.mxu0 0.0
    %v1890 = vand.u32 %v81, 4294901760
    %v1891 = vsub.f32 %v81, %v1890
    %v1892 = vand.u32 %v1891, 4294901760
    %v1893 = vsub.f32 %v1891, %v1892
    %v1894 = vand.u32 %v1893, 4294901760
    %1895 = vmatmul.mubr.f32.gmra.mrb[0].mxu0 %v1894
    %v1896 = vpop.f32.mrb[0].mxu0
    %v1897 = vadd.f32 0.0, %v1896
    %v1898 = vpop.f32.mrb[0].mxu0
    %v1899 = vadd.f32 0.0, %v1898
    %1900 = vdwg.mxu0
    %v1901 = vand.u32 %v46, 4294901760
    %v1902 = vsub.f32 %v46, %v1901
    %v1903 = vand.u32 %v1902, 4294901760
    %v1904 = vsub.f32 %v1902, %v1903
    %v1905 = vand.u32 %v1904, 4294901760
    %1906 = vmatprep.subr.mxu0 %v1905
    %v1907 = vand.u32 %v45, 4294901760
    %v1908 = vsub.f32 %v45, %v1907
    %v1909 = vand.u32 %v1908, 4294901760
    %v1910 = vsub.f32 %v1908, %v1909
    %v1911 = vand.u32 %v1910, 4294901760
    %1912 = vmatpush1.msra.mxu0 %v1911
    %v1913 = vand.u32 %v54, 4294901760
    %v1914 = vsub.f32 %v54, %v1913
    %v1915 = vand.u32 %v1914, 4294901760
    %v1916 = vsub.f32 %v1914, %v1915
    %v1917 = vand.u32 %v1916, 4294901760
    %1918 = vmatprep.subr.mxu0 %v1917
    %v1919 = vand.u32 %v53, 4294901760
    %v1920 = vsub.f32 %v53, %v1919
    %v1921 = vand.u32 %v1920, 4294901760
    %v1922 = vsub.f32 %v1920, %v1921
    %v1923 = vand.u32 %v1922, 4294901760
    %1924 = vmatpush1.msra.mxu0 %v1923
    %v1925 = vand.u32 %v62, 4294901760
    %v1926 = vsub.f32 %v62, %v1925
    %v1927 = vand.u32 %v1926, 4294901760
    %v1928 = vsub.f32 %v1926, %v1927
    %v1929 = vand.u32 %v1928, 4294901760
    %1930 = vmatprep.subr.mxu0 %v1929
    %v1931 = vand.u32 %v61, 4294901760
    %v1932 = vsub.f32 %v61, %v1931
    %v1933 = vand.u32 %v1932, 4294901760
    %v1934 = vsub.f32 %v1932, %v1933
    %v1935 = vand.u32 %v1934, 4294901760
    %1936 = vmatpush1.msra.mxu0 %v1935
    %v1937 = vand.u32 %v70, 4294901760
    %v1938 = vsub.f32 %v70, %v1937
    %v1939 = vand.u32 %v1938, 4294901760
    %v1940 = vsub.f32 %v1938, %v1939
    %v1941 = vand.u32 %v1940, 4294901760
    %1942 = vmatprep.subr.mxu0 %v1941
    %v1943 = vand.u32 %v69, 4294901760
    %v1944 = vsub.f32 %v69, %v1943
    %v1945 = vand.u32 %v1944, 4294901760
    %v1946 = vsub.f32 %v1944, %v1945
    %v1947 = vand.u32 %v1946, 4294901760
    %1948 = vmatpush1.msra.mxu0 %v1947
    %v1949 = vand.u32 %v106, 4294901760
    %v1950 = vsub.f32 %v106, %v1949
    %v1951 = vand.u32 %v1950, 4294901760
    %v1952 = vsub.f32 %v1950, %v1951
    %v1953 = vand.u32 %v1952, 4294901760
    %1954 = vmatprep.subr.mxu0 %v1953
    %v1955 = vand.u32 %v103, 4294901760
    %v1956 = vsub.f32 %v103, %v1955
    %v1957 = vand.u32 %v1956, 4294901760
    %v1958 = vsub.f32 %v1956, %v1957
    %v1959 = vand.u32 %v1958, 4294901760
    %1960 = vmatpush1.msra.mxu0 %v1959
    %1961 = vmatprep.subr.mxu0 0.0
    %1962 = vmatpush1.msra.mxu0 0.0
    %1963 = vmatprep.subr.mxu0 0.0
    %1964 = vmatpush1.msra.mxu0 0.0
    %1965 = vmatprep.subr.mxu0 0.0
    %1966 = vmatpush1.msra.mxu0 0.0
    %1967 = vmatprep.subr.mxu0 0.0
    %1968 = vmatpush1.msra.mxu0 0.0
    %1969 = vmatprep.subr.mxu0 0.0
    %1970 = vmatpush1.msra.mxu0 0.0
    %1971 = vmatprep.subr.mxu0 0.0
    %1972 = vmatpush1.msra.mxu0 0.0
    %1973 = vmatprep.subr.mxu0 0.0
    %1974 = vmatpush1.msra.mxu0 0.0
    %1975 = vmatprep.subr.mxu0 0.0
    %1976 = vmatpush1.msra.mxu0 0.0
    %1977 = vmatprep.subr.mxu0 0.0
    %1978 = vmatpush1.msra.mxu0 0.0
    %1979 = vmatprep.subr.mxu0 0.0
    %1980 = vmatpush1.msra.mxu0 0.0
    %1981 = vmatprep.subr.mxu0 0.0
    %1982 = vmatpush1.msra.mxu0 0.0
    %1983 = vmatprep.subr.mxu0 0.0
    %1984 = vmatpush1.msra.mxu0 0.0
    %1985 = vmatprep.subr.mxu0 0.0
    %1986 = vmatpush1.msra.mxu0 0.0
    %1987 = vmatprep.subr.mxu0 0.0
    %1988 = vmatpush1.msra.mxu0 0.0
    %1989 = vmatprep.subr.mxu0 0.0
    %1990 = vmatpush1.msra.mxu0 0.0
    %1991 = vmatprep.subr.mxu0 0.0
    %1992 = vmatpush1.msra.mxu0 0.0
    %1993 = vmatprep.subr.mxu0 0.0
    %1994 = vmatpush1.msra.mxu0 0.0
    %1995 = vmatprep.subr.mxu0 0.0
    %1996 = vmatpush1.msra.mxu0 0.0
    %1997 = vmatprep.subr.mxu0 0.0
    %1998 = vmatpush1.msra.mxu0 0.0
    %1999 = vmatprep.subr.mxu0 0.0
    %2000 = vmatpush1.msra.mxu0 0.0
    %2001 = vmatprep.subr.mxu0 0.0
    %2002 = vmatpush1.msra.mxu0 0.0
    %2003 = vmatprep.subr.mxu0 0.0
    %2004 = vmatpush1.msra.mxu0 0.0
    %2005 = vmatprep.subr.mxu0 0.0
    %2006 = vmatpush1.msra.mxu0 0.0
    %2007 = vmatprep.subr.mxu0 0.0
    %2008 = vmatpush1.msra.mxu0 0.0
    %2009 = vmatprep.subr.mxu0 0.0
    %2010 = vmatpush1.msra.mxu0 0.0
    %2011 = vmatprep.subr.mxu0 0.0
    %2012 = vmatpush1.msra.mxu0 0.0
    %2013 = vmatprep.subr.mxu0 0.0
    %2014 = vmatpush1.msra.mxu0 0.0
    %2015 = vmatprep.mubr.f32.mxu0 0.0
    %v2016 = vand.u32 %v81, 4294901760
    %2017 = vmatmul.mubr.f32.gmra.mrb[0].mxu0 %v2016
    %v2018 = vpop.f32.mrb[0].mxu0
    %v2019 = vadd.f32 %v1897, %v2018
    %v2020 = vpop.f32.mrb[0].mxu0
    %v2021 = vadd.f32 %v1899, %v2020
    %2022 = vdwg.mxu0
    %v2023 = vand.u32 %v46, 4294901760
    %v2024 = vsub.f32 %v46, %v2023
    %2025 = vmatprep.subr.mxu0 %v2024
    %v2026 = vand.u32 %v45, 4294901760
    %v2027 = vsub.f32 %v45, %v2026
    %2028 = vmatpush1.msra.mxu0 %v2027
    %v2029 = vand.u32 %v54, 4294901760
    %v2030 = vsub.f32 %v54, %v2029
    %2031 = vmatprep.subr.mxu0 %v2030
    %v2032 = vand.u32 %v53, 4294901760
    %v2033 = vsub.f32 %v53, %v2032
    %2034 = vmatpush1.msra.mxu0 %v2033
    %v2035 = vand.u32 %v62, 4294901760
    %v2036 = vsub.f32 %v62, %v2035
    %2037 = vmatprep.subr.mxu0 %v2036
    %v2038 = vand.u32 %v61, 4294901760
    %v2039 = vsub.f32 %v61, %v2038
    %2040 = vmatpush1.msra.mxu0 %v2039
    %v2041 = vand.u32 %v70, 4294901760
    %v2042 = vsub.f32 %v70, %v2041
    %2043 = vmatprep.subr.mxu0 %v2042
    %v2044 = vand.u32 %v69, 4294901760
    %v2045 = vsub.f32 %v69, %v2044
    %2046 = vmatpush1.msra.mxu0 %v2045
    %v2047 = vand.u32 %v106, 4294901760
    %v2048 = vsub.f32 %v106, %v2047
    %2049 = vmatprep.subr.mxu0 %v2048
    %v2050 = vand.u32 %v103, 4294901760
    %v2051 = vsub.f32 %v103, %v2050
    %2052 = vmatpush1.msra.mxu0 %v2051
    %2053 = vmatprep.subr.mxu0 0.0
    %2054 = vmatpush1.msra.mxu0 0.0
    %2055 = vmatprep.subr.mxu0 0.0
    %2056 = vmatpush1.msra.mxu0 0.0
    %2057 = vmatprep.subr.mxu0 0.0
    %2058 = vmatpush1.msra.mxu0 0.0
    %2059 = vmatprep.subr.mxu0 0.0
    %2060 = vmatpush1.msra.mxu0 0.0
    %2061 = vmatprep.subr.mxu0 0.0
    %2062 = vmatpush1.msra.mxu0 0.0
    %2063 = vmatprep.subr.mxu0 0.0
    %2064 = vmatpush1.msra.mxu0 0.0
    %2065 = vmatprep.subr.mxu0 0.0
    %2066 = vmatpush1.msra.mxu0 0.0
    %2067 = vmatprep.subr.mxu0 0.0
    %2068 = vmatpush1.msra.mxu0 0.0
    %2069 = vmatprep.subr.mxu0 0.0
    %2070 = vmatpush1.msra.mxu0 0.0
    %2071 = vmatprep.subr.mxu0 0.0
    %2072 = vmatpush1.msra.mxu0 0.0
    %2073 = vmatprep.subr.mxu0 0.0
    %2074 = vmatpush1.msra.mxu0 0.0
    %2075 = vmatprep.subr.mxu0 0.0
    %2076 = vmatpush1.msra.mxu0 0.0
    %2077 = vmatprep.subr.mxu0 0.0
    %2078 = vmatpush1.msra.mxu0 0.0
    %2079 = vmatprep.subr.mxu0 0.0
    %2080 = vmatpush1.msra.mxu0 0.0
    %2081 = vmatprep.subr.mxu0 0.0
    %2082 = vmatpush1.msra.mxu0 0.0
    %2083 = vmatprep.subr.mxu0 0.0
    %2084 = vmatpush1.msra.mxu0 0.0
    %2085 = vmatprep.subr.mxu0 0.0
    %2086 = vmatpush1.msra.mxu0 0.0
    %2087 = vmatprep.subr.mxu0 0.0
    %2088 = vmatpush1.msra.mxu0 0.0
    %2089 = vmatprep.subr.mxu0 0.0
    %2090 = vmatpush1.msra.mxu0 0.0
    %2091 = vmatprep.subr.mxu0 0.0
    %2092 = vmatpush1.msra.mxu0 0.0
    %2093 = vmatprep.subr.mxu0 0.0
    %2094 = vmatpush1.msra.mxu0 0.0
    %2095 = vmatprep.subr.mxu0 0.0
    %2096 = vmatpush1.msra.mxu0 0.0
    %2097 = vmatprep.subr.mxu0 0.0
    %2098 = vmatpush1.msra.mxu0 0.0
    %2099 = vmatprep.subr.mxu0 0.0
    %2100 = vmatpush1.msra.mxu0 0.0
    %2101 = vmatprep.subr.mxu0 0.0
    %2102 = vmatpush1.msra.mxu0 0.0
    %2103 = vmatprep.subr.mxu0 0.0
    %2104 = vmatpush1.msra.mxu0 0.0
    %2105 = vmatprep.subr.mxu0 0.0
    %2106 = vmatpush1.msra.mxu0 0.0
    %2107 = vmatprep.mubr.f32.mxu0 0.0
    %v2108 = vand.u32 %v81, 4294901760
    %v2109 = vsub.f32 %v81, %v2108
    %2110 = vmatmul.mubr.f32.gmra.mrb[0].mxu0 %v2109
    %v2111 = vpop.f32.mrb[0].mxu0
    %v2112 = vadd.f32 %v2019, %v2111
    %v2113 = vpop.f32.mrb[0].mxu0
    %v2114 = vadd.f32 %v2021, %v2113
    %2115 = vdwg.mxu0
    %v2116 = vand.u32 %v46, 4294901760
    %2117 = vmatprep.subr.mxu0 %v2116
    %v2118 = vand.u32 %v45, 4294901760
    %2119 = vmatpush1.msra.mxu0 %v2118
    %v2120 = vand.u32 %v54, 4294901760
    %2121 = vmatprep.subr.mxu0 %v2120
    %v2122 = vand.u32 %v53, 4294901760
    %2123 = vmatpush1.msra.mxu0 %v2122
    %v2124 = vand.u32 %v62, 4294901760
    %2125 = vmatprep.subr.mxu0 %v2124
    %v2126 = vand.u32 %v61, 4294901760
    %2127 = vmatpush1.msra.mxu0 %v2126
    %v2128 = vand.u32 %v70, 4294901760
    %2129 = vmatprep.subr.mxu0 %v2128
    %v2130 = vand.u32 %v69, 4294901760
    %2131 = vmatpush1.msra.mxu0 %v2130
    %v2132 = vand.u32 %v106, 4294901760
    %2133 = vmatprep.subr.mxu0 %v2132
    %v2134 = vand.u32 %v103, 4294901760
    %2135 = vmatpush1.msra.mxu0 %v2134
    %2136 = vmatprep.subr.mxu0 0.0
    %2137 = vmatpush1.msra.mxu0 0.0
    %2138 = vmatprep.subr.mxu0 0.0
    %2139 = vmatpush1.msra.mxu0 0.0
    %2140 = vmatprep.subr.mxu0 0.0
    %2141 = vmatpush1.msra.mxu0 0.0
    %2142 = vmatprep.subr.mxu0 0.0
    %2143 = vmatpush1.msra.mxu0 0.0
    %2144 = vmatprep.subr.mxu0 0.0
    %2145 = vmatpush1.msra.mxu0 0.0
    %2146 = vmatprep.subr.mxu0 0.0
    %2147 = vmatpush1.msra.mxu0 0.0
    %2148 = vmatprep.subr.mxu0 0.0
    %2149 = vmatpush1.msra.mxu0 0.0
    %2150 = vmatprep.subr.mxu0 0.0
    %2151 = vmatpush1.msra.mxu0 0.0
    %2152 = vmatprep.subr.mxu0 0.0
    %2153 = vmatpush1.msra.mxu0 0.0
    %2154 = vmatprep.subr.mxu0 0.0
    %2155 = vmatpush1.msra.mxu0 0.0
    %2156 = vmatprep.subr.mxu0 0.0
    %2157 = vmatpush1.msra.mxu0 0.0
    %2158 = vmatprep.subr.mxu0 0.0
    %2159 = vmatpush1.msra.mxu0 0.0
    %2160 = vmatprep.subr.mxu0 0.0
    %2161 = vmatpush1.msra.mxu0 0.0
    %2162 = vmatprep.subr.mxu0 0.0
    %2163 = vmatpush1.msra.mxu0 0.0
    %2164 = vmatprep.subr.mxu0 0.0
    %2165 = vmatpush1.msra.mxu0 0.0
    %2166 = vmatprep.subr.mxu0 0.0
    %2167 = vmatpush1.msra.mxu0 0.0
    %2168 = vmatprep.subr.mxu0 0.0
    %2169 = vmatpush1.msra.mxu0 0.0
    %2170 = vmatprep.subr.mxu0 0.0
    %2171 = vmatpush1.msra.mxu0 0.0
    %2172 = vmatprep.subr.mxu0 0.0
    %2173 = vmatpush1.msra.mxu0 0.0
    %2174 = vmatprep.subr.mxu0 0.0
    %2175 = vmatpush1.msra.mxu0 0.0
    %2176 = vmatprep.subr.mxu0 0.0
    %2177 = vmatpush1.msra.mxu0 0.0
    %2178 = vmatprep.subr.mxu0 0.0
    %2179 = vmatpush1.msra.mxu0 0.0
    %2180 = vmatprep.subr.mxu0 0.0
    %2181 = vmatpush1.msra.mxu0 0.0
    %2182 = vmatprep.subr.mxu0 0.0
    %2183 = vmatpush1.msra.mxu0 0.0
    %2184 = vmatprep.subr.mxu0 0.0
    %2185 = vmatpush1.msra.mxu0 0.0
    %2186 = vmatprep.subr.mxu0 0.0
    %2187 = vmatpush1.msra.mxu0 0.0
    %2188 = vmatprep.subr.mxu0 0.0
    %2189 = vmatpush1.msra.mxu0 0.0
    %2190 = vmatprep.mubr.f32.mxu0 0.0
    %v2191 = vand.u32 %v81, 4294901760
    %v2192 = vsub.f32 %v81, %v2191
    %v2193 = vand.u32 %v2192, 4294901760
    %2194 = vmatmul.mubr.f32.gmra.mrb[0].mxu0 %v2193
    %v2195 = vpop.f32.mrb[0].mxu0
    %v2196 = vadd.f32 %v2112, %v2195
    %v2197 = vpop.f32.mrb[0].mxu0
    %v2198 = vadd.f32 %v2114, %v2197
    %2199 = vdwg.mxu0
    %v2200 = vand.u32 %v46, 4294901760
    %v2201 = vsub.f32 %v46, %v2200
    %v2202 = vand.u32 %v2201, 4294901760
    %2203 = vmatprep.subr.mxu0 %v2202
    %v2204 = vand.u32 %v45, 4294901760
    %v2205 = vsub.f32 %v45, %v2204
    %v2206 = vand.u32 %v2205, 4294901760
    %2207 = vmatpush1.msra.mxu0 %v2206
    %v2208 = vand.u32 %v54, 4294901760
    %v2209 = vsub.f32 %v54, %v2208
    %v2210 = vand.u32 %v2209, 4294901760
    %2211 = vmatprep.subr.mxu0 %v2210
    %v2212 = vand.u32 %v53, 4294901760
    %v2213 = vsub.f32 %v53, %v2212
    %v2214 = vand.u32 %v2213, 4294901760
    %2215 = vmatpush1.msra.mxu0 %v2214
    %v2216 = vand.u32 %v62, 4294901760
    %v2217 = vsub.f32 %v62, %v2216
    %v2218 = vand.u32 %v2217, 4294901760
    %2219 = vmatprep.subr.mxu0 %v2218
    %v2220 = vand.u32 %v61, 4294901760
    %v2221 = vsub.f32 %v61, %v2220
    %v2222 = vand.u32 %v2221, 4294901760
    %2223 = vmatpush1.msra.mxu0 %v2222
    %v2224 = vand.u32 %v70, 4294901760
    %v2225 = vsub.f32 %v70, %v2224
    %v2226 = vand.u32 %v2225, 4294901760
    %2227 = vmatprep.subr.mxu0 %v2226
    %v2228 = vand.u32 %v69, 4294901760
    %v2229 = vsub.f32 %v69, %v2228
    %v2230 = vand.u32 %v2229, 4294901760
    %2231 = vmatpush1.msra.mxu0 %v2230
    %v2232 = vand.u32 %v106, 4294901760
    %v2233 = vsub.f32 %v106, %v2232
    %v2234 = vand.u32 %v2233, 4294901760
    %2235 = vmatprep.subr.mxu0 %v2234
    %v2236 = vand.u32 %v103, 4294901760
    %v2237 = vsub.f32 %v103, %v2236
    %v2238 = vand.u32 %v2237, 4294901760
    %2239 = vmatpush1.msra.mxu0 %v2238
    %2240 = vmatprep.subr.mxu0 0.0
    %2241 = vmatpush1.msra.mxu0 0.0
    %2242 = vmatprep.subr.mxu0 0.0
    %2243 = vmatpush1.msra.mxu0 0.0
    %2244 = vmatprep.subr.mxu0 0.0
    %2245 = vmatpush1.msra.mxu0 0.0
    %2246 = vmatprep.subr.mxu0 0.0
    %2247 = vmatpush1.msra.mxu0 0.0
    %2248 = vmatprep.subr.mxu0 0.0
    %2249 = vmatpush1.msra.mxu0 0.0
    %2250 = vmatprep.subr.mxu0 0.0
    %2251 = vmatpush1.msra.mxu0 0.0
    %2252 = vmatprep.subr.mxu0 0.0
    %2253 = vmatpush1.msra.mxu0 0.0
    %2254 = vmatprep.subr.mxu0 0.0
    %2255 = vmatpush1.msra.mxu0 0.0
    %2256 = vmatprep.subr.mxu0 0.0
    %2257 = vmatpush1.msra.mxu0 0.0
    %2258 = vmatprep.subr.mxu0 0.0
    %2259 = vmatpush1.msra.mxu0 0.0
    %2260 = vmatprep.subr.mxu0 0.0
    %2261 = vmatpush1.msra.mxu0 0.0
    %2262 = vmatprep.subr.mxu0 0.0
    %2263 = vmatpush1.msra.mxu0 0.0
    %2264 = vmatprep.subr.mxu0 0.0
    %2265 = vmatpush1.msra.mxu0 0.0
    %2266 = vmatprep.subr.mxu0 0.0
    %2267 = vmatpush1.msra.mxu0 0.0
    %2268 = vmatprep.subr.mxu0 0.0
    %2269 = vmatpush1.msra.mxu0 0.0
    %2270 = vmatprep.subr.mxu0 0.0
    %2271 = vmatpush1.msra.mxu0 0.0
    %2272 = vmatprep.subr.mxu0 0.0
    %2273 = vmatpush1.msra.mxu0 0.0
    %2274 = vmatprep.subr.mxu0 0.0
    %2275 = vmatpush1.msra.mxu0 0.0
    %2276 = vmatprep.subr.mxu0 0.0
    %2277 = vmatpush1.msra.mxu0 0.0
    %2278 = vmatprep.subr.mxu0 0.0
    %2279 = vmatpush1.msra.mxu0 0.0
    %2280 = vmatprep.subr.mxu0 0.0
    %2281 = vmatpush1.msra.mxu0 0.0
    %2282 = vmatprep.subr.mxu0 0.0
    %2283 = vmatpush1.msra.mxu0 0.0
    %2284 = vmatprep.subr.mxu0 0.0
    %2285 = vmatpush1.msra.mxu0 0.0
    %2286 = vmatprep.subr.mxu0 0.0
    %2287 = vmatpush1.msra.mxu0 0.0
    %2288 = vmatprep.subr.mxu0 0.0
    %2289 = vmatpush1.msra.mxu0 0.0
    %2290 = vmatprep.subr.mxu0 0.0
    %2291 = vmatpush1.msra.mxu0 0.0
    %2292 = vmatprep.subr.mxu0 0.0
    %2293 = vmatpush1.msra.mxu0 0.0
    %2294 = vmatprep.mubr.f32.mxu0 0.0
    %v2295 = vand.u32 %v81, 4294901760
    %2296 = vmatmul.mubr.f32.gmra.mrb[0].mxu0 %v2295
    %v2297 = vpop.f32.mrb[0].mxu0
    %v2298 = vadd.f32 %v2196, %v2297
    %v2299 = vpop.f32.mrb[0].mxu0
    %v2300 = vadd.f32 %v2198, %v2299
    %2301 = vdwg.mxu0
    %v2302 = vand.u32 %v46, 4294901760
    %2303 = vmatprep.subr.mxu0 %v2302
    %v2304 = vand.u32 %v45, 4294901760
    %2305 = vmatpush1.msra.mxu0 %v2304
    %v2306 = vand.u32 %v54, 4294901760
    %2307 = vmatprep.subr.mxu0 %v2306
    %v2308 = vand.u32 %v53, 4294901760
    %2309 = vmatpush1.msra.mxu0 %v2308
    %v2310 = vand.u32 %v62, 4294901760
    %2311 = vmatprep.subr.mxu0 %v2310
    %v2312 = vand.u32 %v61, 4294901760
    %2313 = vmatpush1.msra.mxu0 %v2312
    %v2314 = vand.u32 %v70, 4294901760
    %2315 = vmatprep.subr.mxu0 %v2314
    %v2316 = vand.u32 %v69, 4294901760
    %2317 = vmatpush1.msra.mxu0 %v2316
    %v2318 = vand.u32 %v106, 4294901760
    %2319 = vmatprep.subr.mxu0 %v2318
    %v2320 = vand.u32 %v103, 4294901760
    %2321 = vmatpush1.msra.mxu0 %v2320
    %2322 = vmatprep.subr.mxu0 0.0
    %2323 = vmatpush1.msra.mxu0 0.0
    %2324 = vmatprep.subr.mxu0 0.0
    %2325 = vmatpush1.msra.mxu0 0.0
    %2326 = vmatprep.subr.mxu0 0.0
    %2327 = vmatpush1.msra.mxu0 0.0
    %2328 = vmatprep.subr.mxu0 0.0
    %2329 = vmatpush1.msra.mxu0 0.0
    %2330 = vmatprep.subr.mxu0 0.0
    %2331 = vmatpush1.msra.mxu0 0.0
    %2332 = vmatprep.subr.mxu0 0.0
    %2333 = vmatpush1.msra.mxu0 0.0
    %2334 = vmatprep.subr.mxu0 0.0
    %2335 = vmatpush1.msra.mxu0 0.0
    %2336 = vmatprep.subr.mxu0 0.0
    %2337 = vmatpush1.msra.mxu0 0.0
    %2338 = vmatprep.subr.mxu0 0.0
    %2339 = vmatpush1.msra.mxu0 0.0
    %2340 = vmatprep.subr.mxu0 0.0
    %2341 = vmatpush1.msra.mxu0 0.0
    %2342 = vmatprep.subr.mxu0 0.0
    %2343 = vmatpush1.msra.mxu0 0.0
    %2344 = vmatprep.subr.mxu0 0.0
    %2345 = vmatpush1.msra.mxu0 0.0
    %2346 = vmatprep.subr.mxu0 0.0
    %2347 = vmatpush1.msra.mxu0 0.0
    %2348 = vmatprep.subr.mxu0 0.0
    %2349 = vmatpush1.msra.mxu0 0.0
    %2350 = vmatprep.subr.mxu0 0.0
    %2351 = vmatpush1.msra.mxu0 0.0
    %2352 = vmatprep.subr.mxu0 0.0
    %2353 = vmatpush1.msra.mxu0 0.0
    %2354 = vmatprep.subr.mxu0 0.0
    %2355 = vmatpush1.msra.mxu0 0.0
    %2356 = vmatprep.subr.mxu0 0.0
    %2357 = vmatpush1.msra.mxu0 0.0
    %2358 = vmatprep.subr.mxu0 0.0
    %2359 = vmatpush1.msra.mxu0 0.0
    %2360 = vmatprep.subr.mxu0 0.0
    %2361 = vmatpush1.msra.mxu0 0.0
    %2362 = vmatprep.subr.mxu0 0.0
    %2363 = vmatpush1.msra.mxu0 0.0
    %2364 = vmatprep.subr.mxu0 0.0
    %2365 = vmatpush1.msra.mxu0 0.0
    %2366 = vmatprep.subr.mxu0 0.0
    %2367 = vmatpush1.msra.mxu0 0.0
    %2368 = vmatprep.subr.mxu0 0.0
    %2369 = vmatpush1.msra.mxu0 0.0
    %2370 = vmatprep.subr.mxu0 0.0
    %2371 = vmatpush1.msra.mxu0 0.0
    %2372 = vmatprep.subr.mxu0 0.0
    %2373 = vmatpush1.msra.mxu0 0.0
    %2374 = vmatprep.subr.mxu0 0.0
    %2375 = vmatpush1.msra.mxu0 0.0
    %2376 = vmatprep.mubr.f32.mxu0 0.0
    %v2377 = vand.u32 %v81, 4294901760
    %2378 = vmatmul.mubr.f32.gmra.mrb[0].mxu0 %v2377
    %v2379 = vpop.f32.mrb[0].mxu0
    %v2380 = vadd.f32 %v2298, %v2379
    %v2381 = vpop.f32.mrb[0].mxu0
    %v2382 = vadd.f32 %v2300, %v2381
    %2383 = vdwg.mxu0
    %v2384 = vand.u32 2147483647, %v673
    %vm2385 = vcmp.le.f32.partialorder %v2384, 0.7853982
    %vm2386 = vcmp.lt.s32.totalorder %v673, 0
    %v2387 = vand.u32 %v673, 2139095040
    %v2388 = vshrl.u32 %v2387, 23
    %v2389 = vsub.s32 %v2388, 127
    %v2390 = vand.u32 2147483647, %v673
    %v2391 = vand.u32 %v2390, 8388607
    %v2392 = vor.u32 %v2391, 8388608
    %v2393 = vsub.s32 0, %v2392
    %v2394 = vadd.s32 %v2389, 1
    %vm2395 = vcmp.gt.s32.totalorder %v2394, 0
    %v2396 = vsel %vm2395, %v2394, 0
    %v2397 = vshrl.u32 %v2396, 5
    %v2398 = vand.u32 %v2396, 31
    %v2399 = vsub.s32 32, %v2398
    %v2400 = vshrl.u32 683565275, %v2399
    %v2401 = vshll.u32 683565275, %v2398
    %v2402 = vshrl.u32 2475754826, %v2399
    %v2403 = vor.u32 %v2401, %v2402
    %v2404 = vshll.u32 2475754826, %v2398
    %v2405 = vshrl.u32 2131351028, %v2399
    %v2406 = vor.u32 %v2404, %v2405
    %v2407 = vshll.u32 2131351028, %v2398
    %v2408 = vshrl.u32 2102212464, %v2399
    %v2409 = vor.u32 %v2407, %v2408
    %v2410 = vshll.u32 2102212464, %v2398
    %v2411 = vshrl.u32 920167782, %v2399
    %v2412 = vor.u32 %v2410, %v2411
    %v2413 = vshll.u32 920167782, %v2398
    %v2414 = vshrl.u32 1326507024, %v2399
    %v2415 = vor.u32 %v2413, %v2414
    %vm2416 = vcmp.lt.s32.totalorder %v2397, 1
    %vm2417 = vcmp.lt.s32.totalorder %v2397, 2
    %vm2418 = vcmp.lt.s32.totalorder %v2397, 3
    %vm2419 = vcmp.lt.s32.totalorder %v2397, 4
    %v2420 = vsel %vm2416, %v2400, %v2403
    %v2421 = vsel %vm2419, %v2409, 2102212464
    %v2422 = vsel %vm2418, %v2406, %v2421
    %v2423 = vsel %vm2417, %v2420, %v2422
    %v2424 = vsel %vm2416, %v2403, %v2406
    %v2425 = vsel %vm2419, %v2412, 920167782
    %v2426 = vsel %vm2418, %v2409, %v2425
    %v2427 = vsel %vm2417, %v2424, %v2426
    %v2428 = vsel %vm2416, %v2406, %v2409
    %v2429 = vsel %vm2419, %v2415, 1326507024
    %v2430 = vsel %vm2418, %v2412, %v2429
    %v2431 = vsel %vm2417, %v2428, %v2430
    %v2432 = vshll.u32 %v2392, 8
    %v2433 = vmul.u32.u64.compose %v2432, %v2431
    %v2434 = vextract.low.u32 %v2433
    %v2435 = vextract.high.u32 %v2433
    %v2436 = vmul.u32.u64.compose %v2432, %v2427
    %v2437 = vextract.low.u32 %v2436
    %v2438 = vextract.high.u32 %v2436
    %v2439 = vmul.u32 %v2432, %v2423
    %v2440 = vadd.s32 %v2435, %v2437
    %vm2441 = vc.u32 %v2435, %v2437
    %v2442 = vadd.s32 %v2438, 1
    %v2443 = vsel %vm2441, %v2442, %v2438
    %v2444 = vadd.s32 %v2439, %v2443
    %v2445 = vadd.s32 %v2444, 536870912
    %v2446 = vshrl.u32 %v2445, 30
    %v2447 = vshll.u32 %v2446, 30
    %v2448 = vsub.s32 %v2444, %v2447
    %vm2449 = vcmp.lt.s32.totalorder %v2448, 0
    %v2450 = vsub.s32 0, %v2448
    %v2451 = vsel %vm2449, %v2450, %v2448
    %v2452 = vclz %v2451
    %v2453 = vsub.s32 %v2452, 2
    %vm2454 = vcmp.gt.s32.totalorder 0, %v2453
    %v2455 = vsel %vm2454, 0, %v2453
    %v2456 = vsub.s32 32, %v2455
    %v2457 = vshll.u32 %v2448, %v2455
    %v2458 = vshrl.u32 %v2440, %v2456
    %v2459 = vor.u32 %v2457, %v2458
    %v2460 = vsub.s32 4294967266, %v2455
    %v2461 = vadd.s32 %v2460, 127
    %v2462 = vshll.u32 %v2461, 23
    %v2463 = vor.u32 4788187, %v2462
    %v2464 = vand.u32 2147483647, %v2463
    %v2466 = vcvt.s32.f32 %v2459
    %v2467 = vmul.f32 %v2466, %v2464
    %v2468 = vxor.u32 %v2467, 2147483648
    %v2469 = vsel %vm2386, %v2468, %v2467
    %v2470 = vsub.s32 4, %v2446
    %v2471 = vsel %vm2386, %v2470, %v2446
    %v2472 = vsel %vm2385, %v673, %v2469
    %v2473 = vsel %vm2385, 0, %v2471
    %v2474 = vcosq.f32.pop %v2472
    %v2475 = vsinq.f32.pop %v2472
    %vm2476 = vweird.f32 %v673
    %v2477 = vand.u32 %v2473, 3
    %vm2478 = vcmp.lt.s32.totalorder %v2477, 2
    %vm2479 = vcmp.eq.s32.totalorder %v2477, 0
    %v2480 = vxor.u32 %v2475, 2147483648
    %v2481 = vsel %vm2479, %v2474, %v2480
    %vm2482 = vcmp.eq.s32.totalorder %v2477, 2
    %v2483 = vxor.u32 %v2474, 2147483648
    %v2484 = vsel %vm2482, %v2483, %v2475
    %v2485 = vsel %vm2478, %v2481, %v2484
    %v2486 = vsel %vm2476, nan, %v2485
    %v2487 = vand.u32 2147483647, %v675
    %vm2488 = vcmp.le.f32.partialorder %v2487, 0.7853982
    %vm2489 = vcmp.lt.s32.totalorder %v675, 0
    %v2490 = vand.u32 %v675, 2139095040
    %v2491 = vshrl.u32 %v2490, 23
    %v2492 = vsub.s32 %v2491, 127
    %v2493 = vand.u32 2147483647, %v675
    %v2494 = vand.u32 %v2493, 8388607
    %v2495 = vor.u32 %v2494, 8388608
    %v2496 = vsub.s32 0, %v2495
    %v2497 = vadd.s32 %v2492, 1
    %vm2498 = vcmp.gt.s32.totalorder %v2497, 0
    %v2499 = vsel %vm2498, %v2497, 0
    %v2500 = vshrl.u32 %v2499, 5
    %v2501 = vand.u32 %v2499, 31
    %v2502 = vsub.s32 32, %v2501
    %v2503 = vshrl.u32 683565275, %v2502
    %v2504 = vshll.u32 683565275, %v2501
    %v2505 = vshrl.u32 2475754826, %v2502
    %v2506 = vor.u32 %v2504, %v2505
    %v2507 = vshll.u32 2475754826, %v2501
    %v2508 = vshrl.u32 2131351028, %v2502
    %v2509 = vor.u32 %v2507, %v2508
    %v2510 = vshll.u32 2131351028, %v2501
    %v2511 = vshrl.u32 2102212464, %v2502
    %v2512 = vor.u32 %v2510, %v2511
    %v2513 = vshll.u32 2102212464, %v2501
    %v2514 = vshrl.u32 920167782, %v2502
    %v2515 = vor.u32 %v2513, %v2514
    %v2516 = vshll.u32 920167782, %v2501
    %v2517 = vshrl.u32 1326507024, %v2502
    %v2518 = vor.u32 %v2516, %v2517
    %vm2519 = vcmp.lt.s32.totalorder %v2500, 1
    %vm2520 = vcmp.lt.s32.totalorder %v2500, 2
    %vm2521 = vcmp.lt.s32.totalorder %v2500, 3
    %vm2522 = vcmp.lt.s32.totalorder %v2500, 4
    %v2523 = vsel %vm2519, %v2503, %v2506
    %v2524 = vsel %vm2522, %v2512, 2102212464
    %v2525 = vsel %vm2521, %v2509, %v2524
    %v2526 = vsel %vm2520, %v2523, %v2525
    %v2527 = vsel %vm2519, %v2506, %v2509
    %v2528 = vsel %vm2522, %v2515, 920167782
    %v2529 = vsel %vm2521, %v2512, %v2528
    %v2530 = vsel %vm2520, %v2527, %v2529
    %v2531 = vsel %vm2519, %v2509, %v2512
    %v2532 = vsel %vm2522, %v2518, 1326507024
    %v2533 = vsel %vm2521, %v2515, %v2532
    %v2534 = vsel %vm2520, %v2531, %v2533
    %v2535 = vshll.u32 %v2495, 8
    %v2536 = vmul.u32.u64.compose %v2535, %v2534
    %v2537 = vextract.low.u32 %v2536
    %v2538 = vextract.high.u32 %v2536
    %v2539 = vmul.u32.u64.compose %v2535, %v2530
    %v2540 = vextract.low.u32 %v2539
    %v2541 = vextract.high.u32 %v2539
    %v2542 = vmul.u32 %v2535, %v2526
    %v2543 = vadd.s32 %v2538, %v2540
    %vm2544 = vc.u32 %v2538, %v2540
    %v2545 = vadd.s32 %v2541, 1
    %v2546 = vsel %vm2544, %v2545, %v2541
    %v2547 = vadd.s32 %v2542, %v2546
    %v2548 = vadd.s32 %v2547, 536870912
    %v2549 = vshrl.u32 %v2548, 30
    %v2550 = vshll.u32 %v2549, 30
    %v2551 = vsub.s32 %v2547, %v2550
    %vm2552 = vcmp.lt.s32.totalorder %v2551, 0
    %v2553 = vsub.s32 0, %v2551
    %v2554 = vsel %vm2552, %v2553, %v2551
    %v2555 = vclz %v2554
    %v2556 = vsub.s32 %v2555, 2
    %vm2557 = vcmp.gt.s32.totalorder 0, %v2556
    %v2558 = vsel %vm2557, 0, %v2556
    %v2559 = vsub.s32 32, %v2558
    %v2560 = vshll.u32 %v2551, %v2558
    %v2561 = vshrl.u32 %v2543, %v2559
    %v2562 = vor.u32 %v2560, %v2561
    %v2563 = vsub.s32 4294967266, %v2558
    %v2564 = vadd.s32 %v2563, 127
    %v2565 = vshll.u32 %v2564, 23
    %v2566 = vor.u32 4788187, %v2565
    %v2567 = vand.u32 2147483647, %v2566
    %v2569 = vcvt.s32.f32 %v2562
    %v2570 = vmul.f32 %v2569, %v2567
    %v2571 = vxor.u32 %v2570, 2147483648
    %v2572 = vsel %vm2489, %v2571, %v2570
    %v2573 = vsub.s32 4, %v2549
    %v2574 = vsel %vm2489, %v2573, %v2549
    %v2575 = vsel %vm2488, %v675, %v2572
    %v2576 = vsel %vm2488, 0, %v2574
    %v2577 = vcosq.f32.pop %v2575
    %v2578 = vsinq.f32.pop %v2575
    %vm2579 = vweird.f32 %v675
    %v2580 = vand.u32 %v2576, 3
    %vm2581 = vcmp.lt.s32.totalorder %v2580, 2
    %vm2582 = vcmp.eq.s32.totalorder %v2580, 0
    %v2583 = vxor.u32 %v2578, 2147483648
    %v2584 = vsel %vm2582, %v2577, %v2583
    %vm2585 = vcmp.eq.s32.totalorder %v2580, 2
    %v2586 = vxor.u32 %v2577, 2147483648
    %v2587 = vsel %vm2585, %v2586, %v2578
    %v2588 = vsel %vm2581, %v2584, %v2587
    %v2589 = vsel %vm2579, nan, %v2588
    %v2590 = vand.u32 2147483647, %v1242
    %vm2591 = vcmp.le.f32.partialorder %v2590, 0.7853982
    %vm2592 = vcmp.lt.s32.totalorder %v1242, 0
    %v2593 = vand.u32 %v1242, 2139095040
    %v2594 = vshrl.u32 %v2593, 23
    %v2595 = vsub.s32 %v2594, 127
    %v2596 = vand.u32 2147483647, %v1242
    %v2597 = vand.u32 %v2596, 8388607
    %v2598 = vor.u32 %v2597, 8388608
    %v2599 = vsub.s32 0, %v2598
    %v2600 = vadd.s32 %v2595, 1
    %vm2601 = vcmp.gt.s32.totalorder %v2600, 0
    %v2602 = vsel %vm2601, %v2600, 0
    %v2603 = vshrl.u32 %v2602, 5
    %v2604 = vand.u32 %v2602, 31
    %v2605 = vsub.s32 32, %v2604
    %v2606 = vshrl.u32 683565275, %v2605
    %v2607 = vshll.u32 683565275, %v2604
    %v2608 = vshrl.u32 2475754826, %v2605
    %v2609 = vor.u32 %v2607, %v2608
    %v2610 = vshll.u32 2475754826, %v2604
    %v2611 = vshrl.u32 2131351028, %v2605
    %v2612 = vor.u32 %v2610, %v2611
    %v2613 = vshll.u32 2131351028, %v2604
    %v2614 = vshrl.u32 2102212464, %v2605
    %v2615 = vor.u32 %v2613, %v2614
    %v2616 = vshll.u32 2102212464, %v2604
    %v2617 = vshrl.u32 920167782, %v2605
    %v2618 = vor.u32 %v2616, %v2617
    %v2619 = vshll.u32 920167782, %v2604
    %v2620 = vshrl.u32 1326507024, %v2605
    %v2621 = vor.u32 %v2619, %v2620
    %vm2622 = vcmp.lt.s32.totalorder %v2603, 1
    %vm2623 = vcmp.lt.s32.totalorder %v2603, 2
    %vm2624 = vcmp.lt.s32.totalorder %v2603, 3
    %vm2625 = vcmp.lt.s32.totalorder %v2603, 4
    %v2626 = vsel %vm2622, %v2606, %v2609
    %v2627 = vsel %vm2625, %v2615, 2102212464
    %v2628 = vsel %vm2624, %v2612, %v2627
    %v2629 = vsel %vm2623, %v2626, %v2628
    %v2630 = vsel %vm2622, %v2609, %v2612
    %v2631 = vsel %vm2625, %v2618, 920167782
    %v2632 = vsel %vm2624, %v2615, %v2631
    %v2633 = vsel %vm2623, %v2630, %v2632
    %v2634 = vsel %vm2622, %v2612, %v2615
    %v2635 = vsel %vm2625, %v2621, 1326507024
    %v2636 = vsel %vm2624, %v2618, %v2635
    %v2637 = vsel %vm2623, %v2634, %v2636
    %v2638 = vshll.u32 %v2598, 8
    %v2639 = vmul.u32.u64.compose %v2638, %v2637
    %v2640 = vextract.low.u32 %v2639
    %v2641 = vextract.high.u32 %v2639
    %v2642 = vmul.u32.u64.compose %v2638, %v2633
    %v2643 = vextract.low.u32 %v2642
    %v2644 = vextract.high.u32 %v2642
    %v2645 = vmul.u32 %v2638, %v2629
    %v2646 = vadd.s32 %v2641, %v2643
    %vm2647 = vc.u32 %v2641, %v2643
    %v2648 = vadd.s32 %v2644, 1
    %v2649 = vsel %vm2647, %v2648, %v2644
    %v2650 = vadd.s32 %v2645, %v2649
    %v2651 = vadd.s32 %v2650, 536870912
    %v2652 = vshrl.u32 %v2651, 30
    %v2653 = vshll.u32 %v2652, 30
    %v2654 = vsub.s32 %v2650, %v2653
    %vm2655 = vcmp.lt.s32.totalorder %v2654, 0
    %v2656 = vsub.s32 0, %v2654
    %v2657 = vsel %vm2655, %v2656, %v2654
    %v2658 = vclz %v2657
    %v2659 = vsub.s32 %v2658, 2
    %vm2660 = vcmp.gt.s32.totalorder 0, %v2659
    %v2661 = vsel %vm2660, 0, %v2659
    %v2662 = vsub.s32 32, %v2661
    %v2663 = vshll.u32 %v2654, %v2661
    %v2664 = vshrl.u32 %v2646, %v2662
    %v2665 = vor.u32 %v2663, %v2664
    %v2666 = vsub.s32 4294967266, %v2661
    %v2667 = vadd.s32 %v2666, 127
    %v2668 = vshll.u32 %v2667, 23
    %v2669 = vor.u32 4788187, %v2668
    %v2670 = vand.u32 2147483647, %v2669
    %v2672 = vcvt.s32.f32 %v2665
    %v2673 = vmul.f32 %v2672, %v2670
    %v2674 = vxor.u32 %v2673, 2147483648
    %v2675 = vsel %vm2592, %v2674, %v2673
    %v2676 = vsub.s32 4, %v2652
    %v2677 = vsel %vm2592, %v2676, %v2652
    %v2678 = vsel %vm2591, %v1242, %v2675
    %v2679 = vsel %vm2591, 0, %v2677
    %v2680 = vcosq.f32.pop %v2678
    %v2681 = vsinq.f32.pop %v2678
    %vm2682 = vweird.f32 %v1242
    %v2683 = vand.u32 %v2679, 3
    %vm2684 = vcmp.lt.s32.totalorder %v2683, 2
    %vm2685 = vcmp.eq.s32.totalorder %v2683, 0
    %v2686 = vxor.u32 %v2681, 2147483648
    %v2687 = vsel %vm2685, %v2680, %v2686
    %vm2688 = vcmp.eq.s32.totalorder %v2683, 2
    %v2689 = vxor.u32 %v2680, 2147483648
    %v2690 = vsel %vm2688, %v2689, %v2681
    %v2691 = vsel %vm2684, %v2687, %v2690
    %v2692 = vsel %vm2682, nan, %v2691
    %v2693 = vand.u32 2147483647, %v1244
    %vm2694 = vcmp.le.f32.partialorder %v2693, 0.7853982
    %vm2695 = vcmp.lt.s32.totalorder %v1244, 0
    %v2696 = vand.u32 %v1244, 2139095040
    %v2697 = vshrl.u32 %v2696, 23
    %v2698 = vsub.s32 %v2697, 127
    %v2699 = vand.u32 2147483647, %v1244
    %v2700 = vand.u32 %v2699, 8388607
    %v2701 = vor.u32 %v2700, 8388608
    %v2702 = vsub.s32 0, %v2701
    %v2703 = vadd.s32 %v2698, 1
    %vm2704 = vcmp.gt.s32.totalorder %v2703, 0
    %v2705 = vsel %vm2704, %v2703, 0
    %v2706 = vshrl.u32 %v2705, 5
    %v2707 = vand.u32 %v2705, 31
    %v2708 = vsub.s32 32, %v2707
    %v2709 = vshrl.u32 683565275, %v2708
    %v2710 = vshll.u32 683565275, %v2707
    %v2711 = vshrl.u32 2475754826, %v2708
    %v2712 = vor.u32 %v2710, %v2711
    %v2713 = vshll.u32 2475754826, %v2707
    %v2714 = vshrl.u32 2131351028, %v2708
    %v2715 = vor.u32 %v2713, %v2714
    %v2716 = vshll.u32 2131351028, %v2707
    %v2717 = vshrl.u32 2102212464, %v2708
    %v2718 = vor.u32 %v2716, %v2717
    %v2719 = vshll.u32 2102212464, %v2707
    %v2720 = vshrl.u32 920167782, %v2708
    %v2721 = vor.u32 %v2719, %v2720
    %v2722 = vshll.u32 920167782, %v2707
    %v2723 = vshrl.u32 1326507024, %v2708
    %v2724 = vor.u32 %v2722, %v2723
    %vm2725 = vcmp.lt.s32.totalorder %v2706, 1
    %vm2726 = vcmp.lt.s32.totalorder %v2706, 2
    %vm2727 = vcmp.lt.s32.totalorder %v2706, 3
    %vm2728 = vcmp.lt.s32.totalorder %v2706, 4
    %v2729 = vsel %vm2725, %v2709, %v2712
    %v2730 = vsel %vm2728, %v2718, 2102212464
    %v2731 = vsel %vm2727, %v2715, %v2730
    %v2732 = vsel %vm2726, %v2729, %v2731
    %v2733 = vsel %vm2725, %v2712, %v2715
    %v2734 = vsel %vm2728, %v2721, 920167782
    %v2735 = vsel %vm2727, %v2718, %v2734
    %v2736 = vsel %vm2726, %v2733, %v2735
    %v2737 = vsel %vm2725, %v2715, %v2718
    %v2738 = vsel %vm2728, %v2724, 1326507024
    %v2739 = vsel %vm2727, %v2721, %v2738
    %v2740 = vsel %vm2726, %v2737, %v2739
    %v2741 = vshll.u32 %v2701, 8
    %v2742 = vmul.u32.u64.compose %v2741, %v2740
    %v2743 = vextract.low.u32 %v2742
    %v2744 = vextract.high.u32 %v2742
    %v2745 = vmul.u32.u64.compose %v2741, %v2736
    %v2746 = vextract.low.u32 %v2745
    %v2747 = vextract.high.u32 %v2745
    %v2748 = vmul.u32 %v2741, %v2732
    %v2749 = vadd.s32 %v2744, %v2746
    %vm2750 = vc.u32 %v2744, %v2746
    %v2751 = vadd.s32 %v2747, 1
    %v2752 = vsel %vm2750, %v2751, %v2747
    %v2753 = vadd.s32 %v2748, %v2752
    %v2754 = vadd.s32 %v2753, 536870912
    %v2755 = vshrl.u32 %v2754, 30
    %v2756 = vshll.u32 %v2755, 30
    %v2757 = vsub.s32 %v2753, %v2756
    %vm2758 = vcmp.lt.s32.totalorder %v2757, 0
    %v2759 = vsub.s32 0, %v2757
    %v2760 = vsel %vm2758, %v2759, %v2757
    %v2761 = vclz %v2760
    %v2762 = vsub.s32 %v2761, 2
    %vm2763 = vcmp.gt.s32.totalorder 0, %v2762
    %v2764 = vsel %vm2763, 0, %v2762
    %v2765 = vsub.s32 32, %v2764
    %v2766 = vshll.u32 %v2757, %v2764
    %v2767 = vshrl.u32 %v2749, %v2765
    %v2768 = vor.u32 %v2766, %v2767
    %v2769 = vsub.s32 4294967266, %v2764
    %v2770 = vadd.s32 %v2769, 127
    %v2771 = vshll.u32 %v2770, 23
    %v2772 = vor.u32 4788187, %v2771
    %v2773 = vand.u32 2147483647, %v2772
    %v2775 = vcvt.s32.f32 %v2768
    %v2776 = vmul.f32 %v2775, %v2773
    %v2777 = vxor.u32 %v2776, 2147483648
    %v2778 = vsel %vm2695, %v2777, %v2776
    %v2779 = vsub.s32 4, %v2755
    %v2780 = vsel %vm2695, %v2779, %v2755
    %v2781 = vsel %vm2694, %v1244, %v2778
    %v2782 = vsel %vm2694, 0, %v2780
    %v2783 = vcosq.f32.pop %v2781
    %v2784 = vsinq.f32.pop %v2781
    %vm2785 = vweird.f32 %v1244
    %v2786 = vand.u32 %v2782, 3
    %vm2787 = vcmp.lt.s32.totalorder %v2786, 2
    %vm2788 = vcmp.eq.s32.totalorder %v2786, 0
    %v2789 = vxor.u32 %v2784, 2147483648
    %v2790 = vsel %vm2788, %v2783, %v2789
    %vm2791 = vcmp.eq.s32.totalorder %v2786, 2
    %v2792 = vxor.u32 %v2783, 2147483648
    %v2793 = vsel %vm2791, %v2792, %v2784
    %v2794 = vsel %vm2787, %v2790, %v2793
    %v2795 = vsel %vm2785, nan, %v2794
    %v2796 = vand.u32 2147483647, %v1811
    %vm2797 = vcmp.le.f32.partialorder %v2796, 0.7853982
    %vm2798 = vcmp.lt.s32.totalorder %v1811, 0
    %v2799 = vand.u32 %v1811, 2139095040
    %v2800 = vshrl.u32 %v2799, 23
    %v2801 = vsub.s32 %v2800, 127
    %v2802 = vand.u32 2147483647, %v1811
    %v2803 = vand.u32 %v2802, 8388607
    %v2804 = vor.u32 %v2803, 8388608
    %v2805 = vsub.s32 0, %v2804
    %v2806 = vadd.s32 %v2801, 1
    %vm2807 = vcmp.gt.s32.totalorder %v2806, 0
    %v2808 = vsel %vm2807, %v2806, 0
    %v2809 = vshrl.u32 %v2808, 5
    %v2810 = vand.u32 %v2808, 31
    %v2811 = vsub.s32 32, %v2810
    %v2812 = vshrl.u32 683565275, %v2811
    %v2813 = vshll.u32 683565275, %v2810
    %v2814 = vshrl.u32 2475754826, %v2811
    %v2815 = vor.u32 %v2813, %v2814
    %v2816 = vshll.u32 2475754826, %v2810
    %v2817 = vshrl.u32 2131351028, %v2811
    %v2818 = vor.u32 %v2816, %v2817
    %v2819 = vshll.u32 2131351028, %v2810
    %v2820 = vshrl.u32 2102212464, %v2811
    %v2821 = vor.u32 %v2819, %v2820
    %v2822 = vshll.u32 2102212464, %v2810
    %v2823 = vshrl.u32 920167782, %v2811
    %v2824 = vor.u32 %v2822, %v2823
    %v2825 = vshll.u32 920167782, %v2810
    %v2826 = vshrl.u32 1326507024, %v2811
    %v2827 = vor.u32 %v2825, %v2826
    %vm2828 = vcmp.lt.s32.totalorder %v2809, 1
    %vm2829 = vcmp.lt.s32.totalorder %v2809, 2
    %vm2830 = vcmp.lt.s32.totalorder %v2809, 3
    %vm2831 = vcmp.lt.s32.totalorder %v2809, 4
    %v2832 = vsel %vm2828, %v2812, %v2815
    %v2833 = vsel %vm2831, %v2821, 2102212464
    %v2834 = vsel %vm2830, %v2818, %v2833
    %v2835 = vsel %vm2829, %v2832, %v2834
    %v2836 = vsel %vm2828, %v2815, %v2818
    %v2837 = vsel %vm2831, %v2824, 920167782
    %v2838 = vsel %vm2830, %v2821, %v2837
    %v2839 = vsel %vm2829, %v2836, %v2838
    %v2840 = vsel %vm2828, %v2818, %v2821
    %v2841 = vsel %vm2831, %v2827, 1326507024
    %v2842 = vsel %vm2830, %v2824, %v2841
    %v2843 = vsel %vm2829, %v2840, %v2842
    %v2844 = vshll.u32 %v2804, 8
    %v2845 = vmul.u32.u64.compose %v2844, %v2843
    %v2846 = vextract.low.u32 %v2845
    %v2847 = vextract.high.u32 %v2845
    %v2848 = vmul.u32.u64.compose %v2844, %v2839
    %v2849 = vextract.low.u32 %v2848
    %v2850 = vextract.high.u32 %v2848
    %v2851 = vmul.u32 %v2844, %v2835
    %v2852 = vadd.s32 %v2847, %v2849
    %vm2853 = vc.u32 %v2847, %v2849
    %v2854 = vadd.s32 %v2850, 1
    %v2855 = vsel %vm2853, %v2854, %v2850
    %v2856 = vadd.s32 %v2851, %v2855
    %v2857 = vadd.s32 %v2856, 536870912
    %v2858 = vshrl.u32 %v2857, 30
    %v2859 = vshll.u32 %v2858, 30
    %v2860 = vsub.s32 %v2856, %v2859
    %vm2861 = vcmp.lt.s32.totalorder %v2860, 0
    %v2862 = vsub.s32 0, %v2860
    %v2863 = vsel %vm2861, %v2862, %v2860
    %v2864 = vclz %v2863
    %v2865 = vsub.s32 %v2864, 2
    %vm2866 = vcmp.gt.s32.totalorder 0, %v2865
    %v2867 = vsel %vm2866, 0, %v2865
    %v2868 = vsub.s32 32, %v2867
    %v2869 = vshll.u32 %v2860, %v2867
    %v2870 = vshrl.u32 %v2852, %v2868
    %v2871 = vor.u32 %v2869, %v2870
    %v2872 = vsub.s32 4294967266, %v2867
    %v2873 = vadd.s32 %v2872, 127
    %v2874 = vshll.u32 %v2873, 23
    %v2875 = vor.u32 4788187, %v2874
    %v2876 = vand.u32 2147483647, %v2875
    %v2878 = vcvt.s32.f32 %v2871
    %v2879 = vmul.f32 %v2878, %v2876
    %v2880 = vxor.u32 %v2879, 2147483648
    %v2881 = vsel %vm2798, %v2880, %v2879
    %v2882 = vsub.s32 4, %v2858
    %v2883 = vsel %vm2798, %v2882, %v2858
    %v2884 = vsel %vm2797, %v1811, %v2881
    %v2885 = vsel %vm2797, 0, %v2883
    %v2886 = vcosq.f32.pop %v2884
    %v2887 = vsinq.f32.pop %v2884
    %vm2888 = vweird.f32 %v1811
    %v2889 = vand.u32 %v2885, 3
    %vm2890 = vcmp.lt.s32.totalorder %v2889, 2
    %vm2891 = vcmp.eq.s32.totalorder %v2889, 0
    %v2892 = vxor.u32 %v2887, 2147483648
    %v2893 = vsel %vm2891, %v2886, %v2892
    %vm2894 = vcmp.eq.s32.totalorder %v2889, 2
    %v2895 = vxor.u32 %v2886, 2147483648
    %v2896 = vsel %vm2894, %v2895, %v2887
    %v2897 = vsel %vm2890, %v2893, %v2896
    %v2898 = vsel %vm2888, nan, %v2897
    %v2899 = vand.u32 2147483647, %v1813
    %vm2900 = vcmp.le.f32.partialorder %v2899, 0.7853982
    %vm2901 = vcmp.lt.s32.totalorder %v1813, 0
    %v2902 = vand.u32 %v1813, 2139095040
    %v2903 = vshrl.u32 %v2902, 23
    %v2904 = vsub.s32 %v2903, 127
    %v2905 = vand.u32 2147483647, %v1813
    %v2906 = vand.u32 %v2905, 8388607
    %v2907 = vor.u32 %v2906, 8388608
    %v2908 = vsub.s32 0, %v2907
    %v2909 = vadd.s32 %v2904, 1
    %vm2910 = vcmp.gt.s32.totalorder %v2909, 0
    %v2911 = vsel %vm2910, %v2909, 0
    %v2912 = vshrl.u32 %v2911, 5
    %v2913 = vand.u32 %v2911, 31
    %v2914 = vsub.s32 32, %v2913
    %v2915 = vshrl.u32 683565275, %v2914
    %v2916 = vshll.u32 683565275, %v2913
    %v2917 = vshrl.u32 2475754826, %v2914
    %v2918 = vor.u32 %v2916, %v2917
    %v2919 = vshll.u32 2475754826, %v2913
    %v2920 = vshrl.u32 2131351028, %v2914
    %v2921 = vor.u32 %v2919, %v2920
    %v2922 = vshll.u32 2131351028, %v2913
    %v2923 = vshrl.u32 2102212464, %v2914
    %v2924 = vor.u32 %v2922, %v2923
    %v2925 = vshll.u32 2102212464, %v2913
    %v2926 = vshrl.u32 920167782, %v2914
    %v2927 = vor.u32 %v2925, %v2926
    %v2928 = vshll.u32 920167782, %v2913
    %v2929 = vshrl.u32 1326507024, %v2914
    %v2930 = vor.u32 %v2928, %v2929
    %vm2931 = vcmp.lt.s32.totalorder %v2912, 1
    %vm2932 = vcmp.lt.s32.totalorder %v2912, 2
    %vm2933 = vcmp.lt.s32.totalorder %v2912, 3
    %vm2934 = vcmp.lt.s32.totalorder %v2912, 4
    %v2935 = vsel %vm2931, %v2915, %v2918
    %v2936 = vsel %vm2934, %v2924, 2102212464
    %v2937 = vsel %vm2933, %v2921, %v2936
    %v2938 = vsel %vm2932, %v2935, %v2937
    %v2939 = vsel %vm2931, %v2918, %v2921
    %v2940 = vsel %vm2934, %v2927, 920167782
    %v2941 = vsel %vm2933, %v2924, %v2940
    %v2942 = vsel %vm2932, %v2939, %v2941
    %v2943 = vsel %vm2931, %v2921, %v2924
    %v2944 = vsel %vm2934, %v2930, 1326507024
    %v2945 = vsel %vm2933, %v2927, %v2944
    %v2946 = vsel %vm2932, %v2943, %v2945
    %v2947 = vshll.u32 %v2907, 8
    %v2948 = vmul.u32.u64.compose %v2947, %v2946
    %v2949 = vextract.low.u32 %v2948
    %v2950 = vextract.high.u32 %v2948
    %v2951 = vmul.u32.u64.compose %v2947, %v2942
    %v2952 = vextract.low.u32 %v2951
    %v2953 = vextract.high.u32 %v2951
    %v2954 = vmul.u32 %v2947, %v2938
    %v2955 = vadd.s32 %v2950, %v2952
    %vm2956 = vc.u32 %v2950, %v2952
    %v2957 = vadd.s32 %v2953, 1
    %v2958 = vsel %vm2956, %v2957, %v2953
    %v2959 = vadd.s32 %v2954, %v2958
    %v2960 = vadd.s32 %v2959, 536870912
    %v2961 = vshrl.u32 %v2960, 30
    %v2962 = vshll.u32 %v2961, 30
    %v2963 = vsub.s32 %v2959, %v2962
    %vm2964 = vcmp.lt.s32.totalorder %v2963, 0
    %v2965 = vsub.s32 0, %v2963
    %v2966 = vsel %vm2964, %v2965, %v2963
    %v2967 = vclz %v2966
    %v2968 = vsub.s32 %v2967, 2
    %vm2969 = vcmp.gt.s32.totalorder 0, %v2968
    %v2970 = vsel %vm2969, 0, %v2968
    %v2971 = vsub.s32 32, %v2970
    %v2972 = vshll.u32 %v2963, %v2970
    %v2973 = vshrl.u32 %v2955, %v2971
    %v2974 = vor.u32 %v2972, %v2973
    %v2975 = vsub.s32 4294967266, %v2970
    %v2976 = vadd.s32 %v2975, 127
    %v2977 = vshll.u32 %v2976, 23
    %v2978 = vor.u32 4788187, %v2977
    %v2979 = vand.u32 2147483647, %v2978
    %v2981 = vcvt.s32.f32 %v2974
    %v2982 = vmul.f32 %v2981, %v2979
    %v2983 = vxor.u32 %v2982, 2147483648
    %v2984 = vsel %vm2901, %v2983, %v2982
    %v2985 = vsub.s32 4, %v2961
    %v2986 = vsel %vm2901, %v2985, %v2961
    %v2987 = vsel %vm2900, %v1813, %v2984
    %v2988 = vsel %vm2900, 0, %v2986
    %v2989 = vcosq.f32.pop %v2987
    %v2990 = vsinq.f32.pop %v2987
    %vm2991 = vweird.f32 %v1813
    %v2992 = vand.u32 %v2988, 3
    %vm2993 = vcmp.lt.s32.totalorder %v2992, 2
    %vm2994 = vcmp.eq.s32.totalorder %v2992, 0
    %v2995 = vxor.u32 %v2990, 2147483648
    %v2996 = vsel %vm2994, %v2989, %v2995
    %vm2997 = vcmp.eq.s32.totalorder %v2992, 2
    %v2998 = vxor.u32 %v2989, 2147483648
    %v2999 = vsel %vm2997, %v2998, %v2990
    %v3000 = vsel %vm2993, %v2996, %v2999
    %v3001 = vsel %vm2991, nan, %v3000
    %v3002 = vand.u32 2147483647, %v2380
    %vm3003 = vcmp.le.f32.partialorder %v3002, 0.7853982
    %vm3004 = vcmp.lt.s32.totalorder %v2380, 0
    %v3005 = vand.u32 %v2380, 2139095040
    %v3006 = vshrl.u32 %v3005, 23
    %v3007 = vsub.s32 %v3006, 127
    %v3008 = vand.u32 2147483647, %v2380
    %v3009 = vand.u32 %v3008, 8388607
    %v3010 = vor.u32 %v3009, 8388608
    %v3011 = vsub.s32 0, %v3010
    %v3012 = vadd.s32 %v3007, 1
    %vm3013 = vcmp.gt.s32.totalorder %v3012, 0
    %v3014 = vsel %vm3013, %v3012, 0
    %v3015 = vshrl.u32 %v3014, 5
    %v3016 = vand.u32 %v3014, 31
    %v3017 = vsub.s32 32, %v3016
    %v3018 = vshrl.u32 683565275, %v3017
    %v3019 = vshll.u32 683565275, %v3016
    %v3020 = vshrl.u32 2475754826, %v3017
    %v3021 = vor.u32 %v3019, %v3020
    %v3022 = vshll.u32 2475754826, %v3016
    %v3023 = vshrl.u32 2131351028, %v3017
    %v3024 = vor.u32 %v3022, %v3023
    %v3025 = vshll.u32 2131351028, %v3016
    %v3026 = vshrl.u32 2102212464, %v3017
    %v3027 = vor.u32 %v3025, %v3026
    %v3028 = vshll.u32 2102212464, %v3016
    %v3029 = vshrl.u32 920167782, %v3017
    %v3030 = vor.u32 %v3028, %v3029
    %v3031 = vshll.u32 920167782, %v3016
    %v3032 = vshrl.u32 1326507024, %v3017
    %v3033 = vor.u32 %v3031, %v3032
    %vm3034 = vcmp.lt.s32.totalorder %v3015, 1
    %vm3035 = vcmp.lt.s32.totalorder %v3015, 2
    %vm3036 = vcmp.lt.s32.totalorder %v3015, 3
    %vm3037 = vcmp.lt.s32.totalorder %v3015, 4
    %v3038 = vsel %vm3034, %v3018, %v3021
    %v3039 = vsel %vm3037, %v3027, 2102212464
    %v3040 = vsel %vm3036, %v3024, %v3039
    %v3041 = vsel %vm3035, %v3038, %v3040
    %v3042 = vsel %vm3034, %v3021, %v3024
    %v3043 = vsel %vm3037, %v3030, 920167782
    %v3044 = vsel %vm3036, %v3027, %v3043
    %v3045 = vsel %vm3035, %v3042, %v3044
    %v3046 = vsel %vm3034, %v3024, %v3027
    %v3047 = vsel %vm3037, %v3033, 1326507024
    %v3048 = vsel %vm3036, %v3030, %v3047
    %v3049 = vsel %vm3035, %v3046, %v3048
    %v3050 = vshll.u32 %v3010, 8
    %v3051 = vmul.u32.u64.compose %v3050, %v3049
    %v3052 = vextract.low.u32 %v3051
    %v3053 = vextract.high.u32 %v3051
    %v3054 = vmul.u32.u64.compose %v3050, %v3045
    %v3055 = vextract.low.u32 %v3054
    %v3056 = vextract.high.u32 %v3054
    %v3057 = vmul.u32 %v3050, %v3041
    %v3058 = vadd.s32 %v3053, %v3055
    %vm3059 = vc.u32 %v3053, %v3055
    %v3060 = vadd.s32 %v3056, 1
    %v3061 = vsel %vm3059, %v3060, %v3056
    %v3062 = vadd.s32 %v3057, %v3061
    %v3063 = vadd.s32 %v3062, 536870912
    %v3064 = vshrl.u32 %v3063, 30
    %v3065 = vshll.u32 %v3064, 30
    %v3066 = vsub.s32 %v3062, %v3065
    %vm3067 = vcmp.lt.s32.totalorder %v3066, 0
    %v3068 = vsub.s32 0, %v3066
    %v3069 = vsel %vm3067, %v3068, %v3066
    %v3070 = vclz %v3069
    %v3071 = vsub.s32 %v3070, 2
    %vm3072 = vcmp.gt.s32.totalorder 0, %v3071
    %v3073 = vsel %vm3072, 0, %v3071
    %v3074 = vsub.s32 32, %v3073
    %v3075 = vshll.u32 %v3066, %v3073
    %v3076 = vshrl.u32 %v3058, %v3074
    %v3077 = vor.u32 %v3075, %v3076
    %v3078 = vsub.s32 4294967266, %v3073
    %v3079 = vadd.s32 %v3078, 127
    %v3080 = vshll.u32 %v3079, 23
    %v3081 = vor.u32 4788187, %v3080
    %v3082 = vand.u32 2147483647, %v3081
    %v3084 = vcvt.s32.f32 %v3077
    %v3085 = vmul.f32 %v3084, %v3082
    %v3086 = vxor.u32 %v3085, 2147483648
    %v3087 = vsel %vm3004, %v3086, %v3085
    %v3088 = vsub.s32 4, %v3064
    %v3089 = vsel %vm3004, %v3088, %v3064
    %v3090 = vsel %vm3003, %v2380, %v3087
    %v3091 = vsel %vm3003, 0, %v3089
    %v3092 = vcosq.f32.pop %v3090
    %v3093 = vsinq.f32.pop %v3090
    %vm3094 = vweird.f32 %v2380
    %v3095 = vand.u32 %v3091, 3
    %vm3096 = vcmp.lt.s32.totalorder %v3095, 2
    %vm3097 = vcmp.eq.s32.totalorder %v3095, 0
    %v3098 = vxor.u32 %v3093, 2147483648
    %v3099 = vsel %vm3097, %v3092, %v3098
    %vm3100 = vcmp.eq.s32.totalorder %v3095, 2
    %v3101 = vxor.u32 %v3092, 2147483648
    %v3102 = vsel %vm3100, %v3101, %v3093
    %v3103 = vsel %vm3096, %v3099, %v3102
    %v3104 = vsel %vm3094, nan, %v3103
    %v3105 = vand.u32 2147483647, %v2382
    %vm3106 = vcmp.le.f32.partialorder %v3105, 0.7853982
    %vm3107 = vcmp.lt.s32.totalorder %v2382, 0
    %v3108 = vand.u32 %v2382, 2139095040
    %v3109 = vshrl.u32 %v3108, 23
    %v3110 = vsub.s32 %v3109, 127
    %v3111 = vand.u32 2147483647, %v2382
    %v3112 = vand.u32 %v3111, 8388607
    %v3113 = vor.u32 %v3112, 8388608
    %v3114 = vsub.s32 0, %v3113
    %v3115 = vadd.s32 %v3110, 1
    %vm3116 = vcmp.gt.s32.totalorder %v3115, 0
    %v3117 = vsel %vm3116, %v3115, 0
    %v3118 = vshrl.u32 %v3117, 5
    %v3119 = vand.u32 %v3117, 31
    %v3120 = vsub.s32 32, %v3119
    %v3121 = vshrl.u32 683565275, %v3120
    %v3122 = vshll.u32 683565275, %v3119
    %v3123 = vshrl.u32 2475754826, %v3120
    %v3124 = vor.u32 %v3122, %v3123
    %v3125 = vshll.u32 2475754826, %v3119
    %v3126 = vshrl.u32 2131351028, %v3120
    %v3127 = vor.u32 %v3125, %v3126
    %v3128 = vshll.u32 2131351028, %v3119
    %v3129 = vshrl.u32 2102212464, %v3120
    %v3130 = vor.u32 %v3128, %v3129
    %v3131 = vshll.u32 2102212464, %v3119
    %v3132 = vshrl.u32 920167782, %v3120
    %v3133 = vor.u32 %v3131, %v3132
    %v3134 = vshll.u32 920167782, %v3119
    %v3135 = vshrl.u32 1326507024, %v3120
    %v3136 = vor.u32 %v3134, %v3135
    %vm3137 = vcmp.lt.s32.totalorder %v3118, 1
    %vm3138 = vcmp.lt.s32.totalorder %v3118, 2
    %vm3139 = vcmp.lt.s32.totalorder %v3118, 3
    %vm3140 = vcmp.lt.s32.totalorder %v3118, 4
    %v3141 = vsel %vm3137, %v3121, %v3124
    %v3142 = vsel %vm3140, %v3130, 2102212464
    %v3143 = vsel %vm3139, %v3127, %v3142
    %v3144 = vsel %vm3138, %v3141, %v3143
    %v3145 = vsel %vm3137, %v3124, %v3127
    %v3146 = vsel %vm3140, %v3133, 920167782
    %v3147 = vsel %vm3139, %v3130, %v3146
    %v3148 = vsel %vm3138, %v3145, %v3147
    %v3149 = vsel %vm3137, %v3127, %v3130
    %v3150 = vsel %vm3140, %v3136, 1326507024
    %v3151 = vsel %vm3139, %v3133, %v3150
    %v3152 = vsel %vm3138, %v3149, %v3151
    %v3153 = vshll.u32 %v3113, 8
    %v3154 = vmul.u32.u64.compose %v3153, %v3152
    %v3155 = vextract.low.u32 %v3154
    %v3156 = vextract.high.u32 %v3154
    %v3157 = vmul.u32.u64.compose %v3153, %v3148
    %v3158 = vextract.low.u32 %v3157
    %v3159 = vextract.high.u32 %v3157
    %v3160 = vmul.u32 %v3153, %v3144
    %v3161 = vadd.s32 %v3156, %v3158
    %vm3162 = vc.u32 %v3156, %v3158
    %v3163 = vadd.s32 %v3159, 1
    %v3164 = vsel %vm3162, %v3163, %v3159
    %v3165 = vadd.s32 %v3160, %v3164
    %v3166 = vadd.s32 %v3165, 536870912
    %v3167 = vshrl.u32 %v3166, 30
    %v3168 = vshll.u32 %v3167, 30
    %v3169 = vsub.s32 %v3165, %v3168
    %vm3170 = vcmp.lt.s32.totalorder %v3169, 0
    %v3171 = vsub.s32 0, %v3169
    %v3172 = vsel %vm3170, %v3171, %v3169
    %v3173 = vclz %v3172
    %v3174 = vsub.s32 %v3173, 2
    %vm3175 = vcmp.gt.s32.totalorder 0, %v3174
    %v3176 = vsel %vm3175, 0, %v3174
    %v3177 = vsub.s32 32, %v3176
    %v3178 = vshll.u32 %v3169, %v3176
    %v3179 = vshrl.u32 %v3161, %v3177
    %v3180 = vor.u32 %v3178, %v3179
    %v3181 = vsub.s32 4294967266, %v3176
    %v3182 = vadd.s32 %v3181, 127
    %v3183 = vshll.u32 %v3182, 23
    %v3184 = vor.u32 4788187, %v3183
    %v3185 = vand.u32 2147483647, %v3184
    %v3187 = vcvt.s32.f32 %v3180
    %v3188 = vmul.f32 %v3187, %v3185
    %v3189 = vxor.u32 %v3188, 2147483648
    %v3190 = vsel %vm3107, %v3189, %v3188
    %v3191 = vsub.s32 4, %v3167
    %v3192 = vsel %vm3107, %v3191, %v3167
    %v3193 = vsel %vm3106, %v2382, %v3190
    %v3194 = vsel %vm3106, 0, %v3192
    %v3195 = vcosq.f32.pop %v3193
    %v3196 = vsinq.f32.pop %v3193
    %vm3197 = vweird.f32 %v2382
    %v3198 = vand.u32 %v3194, 3
    %vm3199 = vcmp.lt.s32.totalorder %v3198, 2
    %vm3200 = vcmp.eq.s32.totalorder %v3198, 0
    %v3201 = vxor.u32 %v3196, 2147483648
    %v3202 = vsel %vm3200, %v3195, %v3201
    %vm3203 = vcmp.eq.s32.totalorder %v3198, 2
    %v3204 = vxor.u32 %v3195, 2147483648
    %v3205 = vsel %vm3203, %v3204, %v3196
    %v3206 = vsel %vm3199, %v3202, %v3205
    %v3207 = vsel %vm3197, nan, %v3206
    %3208 = vst [vmem:[#allocation7] sm:$0xff] %v2486
    %3209 = vst [vmem:[#allocation7 + $0x8] sm:$0xff] %v2589
    %3210 = vst [vmem:[#allocation7 + $0x10] sm:$0xff] %v2692
    %3211 = vst [vmem:[#allocation7 + $0x18] sm:$0xff] %v2795
    %3212 = vst [vmem:[#allocation7 + $0x20] sm:$0xff] %v2898
    %3213 = vst [vmem:[#allocation7 + $0x28] sm:$0xff] %v3001
    %3214 = vst [vmem:[#allocation7 + $0x30] sm:$0xff] %v3104
    %3215 = vst [vmem:[#allocation7 + $0x38] sm:$0xff] %v3207
    // Predicated region
    $region18: #{tpu_custom_call.1} parent=1 // pred_check
      _
    $region19: #{tpu_custom_call.1} parent=1 // pred_check_branch
      %3217 = sbr.rel (0) target = $region21
    $region20: #{tpu_custom_call.1} parent=1 // pred_region
      %s3219 = ssub.s32 1024, 1024
      %3220 = vsyncadd [#allocation4], %s3219
      %s3222 = sshll.u32 [#allocation7], 4
      %s3223 = int_to_ptr.vmem [resolvable:$true] %s3222
      %3225 = dma.vmem_to_hbm [thread:$0]  %s3223, 1024, %s2, [#allocation4]
    $region21: #{tpu_custom_call.1} parent=1 // pred_fallthru
      _
    // Predicated region
    $region22: #{tpu_custom_call.1} parent=1 // pred_check
      _
    $region23: #{tpu_custom_call.1} parent=1 // pred_check_branch
      %3227 = sbr.rel (0) target = $region25
    $region24: #{tpu_custom_call.1} parent=1 // pred_region
      %3228 = dma.done [#allocation4], 1024
    $region25: #{tpu_custom_call.1} parent=1 // pred_fallthru
      _
    %3229 = vsyncpa [#allocation3], 1
    %3230 = vsyncpa [#allocation6], 1
    %3231 = vsyncpa [#allocation4], 1

</llo_original>
